<compile_context>
chip_gen: v5e
topology: v5e:2x2
jax: 0.10.0
libtpu: 0.0.40
codegen_flags: <defaults>
</compile_context>

<pallas_src>
import jax
import jax.numpy as jnp
from jax import lax
from jax.experimental import pallas as pl
from jax.experimental.pallas import tpu as pltpu

LANE = 128      # feature-dim padding granule (vreg lanes / MXU dim)
SUBLANE = 8     # node-row padding granule


# -----------------------------------------------------------------------------
# Pallas kernel: fused 4x(GCN+foldedBN+ReLU) + mean-pool + fc1/ReLU + fc2
# One grid step processes one block of `gb` graphs packed block-diagonally.
# -----------------------------------------------------------------------------
def _make_kernel(pool: bool, gb: int, n_pad: int, n_real: int, n_layers: int = 4):
    inv_n = 1.0 / float(n_real)

    def kernel(x_ref, a_ref, w_ref, s_ref, fcw_ref, fcb_ref, o_ref):
        a = a_ref[0]                      # [GBN, GBN] bf16 block-diag norm. adjacency
        h = x_ref[0]                      # [GBN, DPAD] bf16 node features
        for l in range(n_layers):
            # GCNConv + folded BN:  A @ (h @ (W*s)) + (b*s + t)   (f32 accumulate)
            xw = jnp.dot(h, w_ref[l], preferred_element_type=jnp.float32)
            agg = jnp.dot(a, xw.astype(jnp.bfloat16),
                          preferred_element_type=jnp.float32)
            h = jnp.maximum(agg + s_ref[l], 0.0).astype(jnp.bfloat16)
        if pool:
            # per-graph mean pool on the VPU/XLU (exact f32 mean):
            # padded node rows (row >= n_real) carry ReLU(bias) garbage -> weight 0
            dpad = h.shape[-1]
            hg = h.astype(jnp.float32).reshape(gb, n_pad, dpad)
            row = lax.broadcasted_iota(jnp.int32, (gb, n_pad, dpad), 1)
            w = jnp.where(row < n_real, inv_n, 0.0)
            h = jnp.sum(hg * w, axis=1).astype(jnp.bfloat16)      # [gb, DPAD]
        # NOTE: in the pool=False path, padded node rows carry ReLU(folded-bias)
        # garbage through the FC layers; they are sliced off in the wrapper.
        f = jnp.dot(h, fcw_ref[0], preferred_element_type=jnp.float32) + fcb_ref[0]
        f = jnp.maximum(f, 0.0).astype(jnp.bfloat16)
        o_ref[0] = jnp.dot(f, fcw_ref[1],
                           preferred_element_type=jnp.float32) + fcb_ref[1]

    return kernel


# -----------------------------------------------------------------------------
# Glue: adjacency normalization, BN folding, parameter packing
# -----------------------------------------------------------------------------
def _round_up(x, m):
    return ((x + m - 1) // m) * m


def _default_graphs_per_block(n_pad):
    """Pick graphs_per_block so GBN matches the MXU granule of this chip:
    128 on v5e (and older), 256 on v6e / v7x. Capped well below any VMEM limit."""
    try:
        kind = jax.devices()[0].device_kind.lower()
    except Exception:
        kind = ""
    old_gen = any(t in kind for t in ("v2", "v3", "v4", "v5"))
    gbn_target = 128 if old_gen else 256
    return max(1, min(gbn_target, 1024) // n_pad)


def _build_norm_adj(edge_index, n):
    """Dense D^{-1/2}(A+I)D^{-1/2}, matching PyG GCNConv with unit edge weights."""
    src, dst = edge_index[0], edge_index[1]
    adj = jnp.zeros((n, n), jnp.float32).at[dst, src].add(1.0)   # duplicates add up
    adj = adj + jnp.eye(n, dtype=jnp.float32)                    # self-loops
    deg = jnp.sum(adj, axis=1)
    dinv = jnp.where(deg > 0, 1.0 / jnp.sqrt(deg), 0.0)
    return dinv[:, None] * adj * dinv[None, :]


def _pack_params(params, dpad, eps=1e-5):
    """Fold eval-mode BN into the GCN weights/bias, zero-pad to [dpad, dpad] and
    pack everything into 4 stacked arrays (cuts DMA descriptor count ~5x).
    NOTE: the BN scale gamma/sqrt(var+eps) is applied before the bf16 cast; with
    pathologically small running_var this could lose precision/overflow in bf16."""
    def pad2(m, r, c):
        return jnp.zeros((r, c), jnp.float32).at[:m.shape[0], :m.shape[1]].set(m)

    w_list, s_list = [], []
    for i in range(1, 5):
        bn = params[f"bn{i}"]
        scale = bn["gamma"] / jnp.sqrt(bn["running_var"] + eps)
        shift = bn["beta"] - bn["running_mean"] * scale
        w_eff = params[f"w{i}"] * scale[None, :]    # fold BN scale into W columns
        b_eff = params[f"b{i}"] * scale + shift     # single per-channel shift
        w_list.append(pad2(w_eff, dpad, dpad))
        s_list.append(pad2(b_eff[None, :], 1, dpad))
    w_stack = jnp.stack(w_list).astype(jnp.bfloat16)        # [4, dpad, dpad] bf16
    shift_stack = jnp.stack(s_list)                          # [4, 1, dpad]    f32
    fcw_stack = jnp.stack([pad2(params["fc1_w"], dpad, dpad),
                           pad2(params["fc2_w"], dpad, dpad)]).astype(jnp.bfloat16)
    fcb_stack = jnp.stack([pad2(params["fc1_b"][None, :], 1, dpad),
                           pad2(params["fc2_b"][None, :], 1, dpad)])
    return w_stack, shift_stack, fcw_stack, fcb_stack


# -----------------------------------------------------------------------------
# Wrappers
# -----------------------------------------------------------------------------
def gnn_forward_graphs(x_graphs, edge_index_graphs, params, *, pool=True,
                       graphs_per_block=None):
    """Apply GNNModel (eval mode) independently to G graphs.

    x_graphs:          [G, N, IN] float32 node features
    edge_index_graphs: [G, 2, E]  int32
    Returns [G, OUT] if pool=True (batch given), else [G, N, OUT] (batch=None).
    """
    g, n, in_dim = x_graphs.shape
    hidden = params["fc1_w"].shape[0]
    out_dim = params["fc2_w"].shape[1]
    dpad = _round_up(max(in_dim, hidden, out_dim), LANE)
    n_pad = _round_up(n, SUBLANE)
    gb = (graphs_per_block if graphs_per_block is not None
          else _default_graphs_per_block(n_pad))
    num_blocks = -(-g // gb)
    g_pad = num_blocks * gb
    gbn = gb * n_pad

    # per-graph normalized adjacency, packed block-diagonally per grid step.
    # Built directly in bf16 via per-graph slice updates (no GBxGB f32 blow-up).
    a = jax.vmap(lambda ei: _build_norm_adj(ei, n))(edge_index_graphs)   # [G, N, N]
    a = jnp.pad(a, ((0, g_pad - g), (0, n_pad - n), (0, n_pad - n))
                ).astype(jnp.bfloat16)
    a4 = a.reshape(num_blocks, gb, n_pad, n_pad)
    a_bd = jnp.zeros((num_blocks, gbn, gbn), jnp.bfloat16)
    for j in range(gb):
        a_bd = a_bd.at[:, j * n_pad:(j + 1) * n_pad,
                       j * n_pad:(j + 1) * n_pad].set(a4[:, j])

    x = jnp.pad(x_graphs, ((0, g_pad - g), (0, n_pad - n), (0, dpad - in_dim)))
    x_b = x.reshape(num_blocks, gbn, dpad).astype(jnp.bfloat16)

    w_stack, shift_stack, fcw_stack, fcb_stack = _pack_params(params, dpad)

    rows_out = gb if pool else gbn

    def _const_spec(shape):
        # resident parameters: constant index map, single pipeline buffer
        nd = len(shape)
        return pl.BlockSpec(shape, lambda b: (0,) * nd,
                            pipeline_mode=pl.Buffered(1))

    out = pl.pallas_call(
        _make_kernel(pool, gb, n_pad, n),
        out_shape=jax.ShapeDtypeStruct((num_blocks, rows_out, dpad), jnp.float32),
        grid_spec=pltpu.PrefetchScalarGridSpec(
            num_scalar_prefetch=0,
            grid=(num_blocks,),
            in_specs=[
                pl.BlockSpec((1, gbn, dpad), lambda b: (b, 0, 0)),   # x block
                pl.BlockSpec((1, gbn, gbn), lambda b: (b, 0, 0)),    # A block
                _const_spec((4, dpad, dpad)),                        # conv weights
                _const_spec((4, 1, dpad)),                           # conv shifts
                _const_spec((2, dpad, dpad)),                        # fc weights
                _const_spec((2, 1, dpad)),                           # fc biases
            ],
            out_specs=pl.BlockSpec((1, rows_out, dpad), lambda b: (b, 0, 0)),
        ),
        compiler_params=pltpu.CompilerParams(
            dimension_semantics=("parallel",),   # graph-block axis -> v7x 2 TCs
            vmem_limit_bytes=32 * 1024 * 1024,
        ),
    )(x_b, a_bd, w_stack, shift_stack, fcw_stack, fcb_stack)

    if pool:
        return out.reshape(g_pad, dpad)[:g, :out_dim]                # [G, OUT]
    return out.reshape(g_pad, n_pad, dpad)[:g, :n, :out_dim]         # [G, N, OUT]


def gnn_forward(x, edge_index, edge_attr, params, batch=None):
    """Single-graph entry matching the torch module signature.
    batch given -> mean-pooled [OUT]; batch=None -> per-node [N, OUT]."""
    del edge_attr  # GCNConv(x, edge_index) ignores edge_attr in this model
    y = gnn_forward_graphs(x[None], edge_index[None], params,
                           pool=(batch is not None), graphs_per_block=1)
    return y[0]


# -----------------------------------------------------------------------------
# Plain-JAX f32 reference (eval-mode GNNModel.forward) for correctness checking
# -----------------------------------------------------------------------------
def reference_forward(x, a_norm, params, pool=True, eps=1e-5):
    h = x
    for i in range(1, 5):
        bn = params[f"bn{i}"]
        h = a_norm @ (h @ params[f"w{i}"]) + params[f"b{i}"]
        h = (h - bn["running_mean"]) / jnp.sqrt(bn["running_var"] + eps)
        h = h * bn["gamma"] + bn["beta"]
        h = jnp.maximum(h, 0.0)
    if pool:
        h = jnp.mean(h, axis=0, keepdims=True)
    f = jnp.maximum(h @ params["fc1_w"] + params["fc1_b"], 0.0)
    out = f @ params["fc2_w"] + params["fc2_b"]
    return out[0] if pool else out


# -----------------------------------------------------------------------------
# Deterministic parameter init + example run
# -----------------------------------------------------------------------------
def init_params(key, input_dim, hidden_dim, output_dim):
    ks = jax.random.split(key, 28)

    def lin(k, fi, fo):
        bound = 1.0 / jnp.sqrt(fi)
        return jax.random.uniform(k, (fi, fo), jnp.float32, -bound, bound)

    p = {}
    dims = [(input_dim, hidden_dim)] + [(hidden_dim, hidden_dim)] * 3
    ki = 0
    for i, (fi, fo) in enumerate(dims, start=1):
        p[f"w{i}"] = lin(ks[ki], fi, fo); ki += 1
        p[f"b{i}"] = 0.1 * jax.random.normal(ks[ki], (fo,), jnp.float32); ki += 1
        p[f"bn{i}"] = {
            "gamma": 1.0 + 0.1 * jax.random.normal(ks[ki], (fo,), jnp.float32),
            "beta": 0.05 * jax.random.normal(ks[ki + 1], (fo,), jnp.float32),
            "running_mean": 0.1 * jax.random.normal(ks[ki + 2], (fo,), jnp.float32),
            "running_var": jax.random.uniform(ks[ki + 3], (fo,), jnp.float32, 0.5, 1.5),
        }
        ki += 4
    p["fc1_w"] = lin(ks[ki], hidden_dim, hidden_dim); ki += 1
    p["fc1_b"] = 0.1 * jax.random.normal(ks[ki], (hidden_dim,), jnp.float32); ki += 1
    p["fc2_w"] = lin(ks[ki], hidden_dim, output_dim); ki += 1
    p["fc2_b"] = 0.1 * jax.random.normal(ks[ki], (output_dim,), jnp.float32); ki += 1
    return p


if __name__ == "__main__":
    N, IN_DIM, HIDDEN, OUT_DIM = 16, 8, 64, 1
    # 128 graphs -> 8 grid steps at GBN=256 (v6e/v7x) or 16 steps at GBN=128 (v5e):
    # deep enough for BlockSpec double-buffering to hide DMA behind the MXU.
    G = 128

    key = jax.random.PRNGKey(0)
    kx, kp = jax.random.split(key)
    x_graphs = jax.random.normal(kx, (G, N, IN_DIM), jnp.float32)

    # bidirectional ring graph per example graph -> edge_index [G, 2, 2N]
    idx = jnp.arange(N, dtype=jnp.int32)
    ring = jnp.concatenate([jnp.stack([idx, (idx + 1) % N]),
                            jnp.stack([(idx + 1) % N, idx])], axis=1)
    edge_index = jnp.broadcast_to(ring[None], (G, 2, ring.shape[1]))

    params = init_params(kp, IN_DIM, HIDDEN, OUT_DIM)

    # pooled path (batch is not None in the torch module): per-graph [OUT]
    y = gnn_forward_graphs(x_graphs, edge_index, params, pool=True)
    jax.block_until_ready(y)
    assert y.shape == (G, OUT_DIM)

    # per-node path (batch=None in the torch module): [N, OUT] per graph
    y_nodes = gnn_forward_graphs(x_graphs, edge_index, params, pool=False)
    jax.block_until_ready(y_nodes)
    assert y_nodes.shape == (G, N, OUT_DIM)

    # f32 reference check (bf16 matmul operands -> loose tolerance)
    a_all = jax.vmap(lambda ei: _build_norm_adj(ei, N))(edge_index)
    ref_pool = jax.vmap(lambda xi, ai: reference_forward(xi, ai, params, pool=True)
                        )(x_graphs, a_all)
    ref_node = jax.vmap(lambda xi, ai: reference_forward(xi, ai, params, pool=False)
                        )(x_graphs, a_all)

    def rel_err(got, want):
        return float(jnp.max(jnp.abs(got - want)) / (jnp.max(jnp.abs(want)) + 1e-6))

    assert rel_err(y, ref_pool) < 5e-2, rel_err(y, ref_pool)
    assert rel_err(y_nodes, ref_node) < 5e-2, rel_err(y_nodes, ref_node)

    print("KERNEL_OK")
</pallas_src>

<mosaic_0001>
module attributes {stable_mosaic.version = 11 : i64} {
  func.func @kernel(%arg0: i32, %arg1: memref<1x256x128xbf16, #tpu.memory_space<vmem>>, %arg2: memref<1x256x256xbf16, #tpu.memory_space<vmem>>, %arg3: memref<4x128x128xbf16, #tpu.memory_space<vmem>>, %arg4: memref<4x1x128xf32, #tpu.memory_space<vmem>>, %arg5: memref<2x128x128xbf16, #tpu.memory_space<vmem>>, %arg6: memref<2x1x128xf32, #tpu.memory_space<vmem>>, %arg7: memref<1x16x128xf32, #tpu.memory_space<vmem>>) attributes {dimension_semantics = [#tpu.dimension_semantics<parallel>], iteration_bounds = array<i64: 8>, scalar_prefetch = 0 : i64, scratch_operands = 0 : i64, tpu.core_type = #tpu.core_type<tc>, window_params = [{transform_indices = @transform_0, window_bounds = array<i64: 1, 256, 128>}, {transform_indices = @transform_1, window_bounds = array<i64: 1, 256, 256>}, {pipeline_mode = #tpu.pipeline_mode<synchronous>, transform_indices = @transform_2, window_bounds = array<i64: 4, 128, 128>}, {pipeline_mode = #tpu.pipeline_mode<synchronous>, transform_indices = @transform_3, window_bounds = array<i64: 4, 1, 128>}, {pipeline_mode = #tpu.pipeline_mode<synchronous>, transform_indices = @transform_4, window_bounds = array<i64: 2, 128, 128>}, {pipeline_mode = #tpu.pipeline_mode<synchronous>, transform_indices = @transform_5, window_bounds = array<i64: 2, 1, 128>}, {transform_indices = @transform_6, window_bounds = array<i64: 1, 16, 128>}]} {
    %c0 = arith.constant 0 : index
    %c0_0 = arith.constant 0 : index
    %c0_1 = arith.constant 0 : index
    %0 = vector.load %arg2[%c0, %c0_0, %c0_1] : memref<1x256x256xbf16, #tpu.memory_space<vmem>>, vector<1x256x256xbf16>
    %1 = vector.shape_cast %0 : vector<1x256x256xbf16> to vector<256x256xbf16>
    %c0_2 = arith.constant 0 : index
    %c0_3 = arith.constant 0 : index
    %c0_4 = arith.constant 0 : index
    %2 = vector.load %arg1[%c0_2, %c0_3, %c0_4] : memref<1x256x128xbf16, #tpu.memory_space<vmem>>, vector<1x256x128xbf16>
    %3 = vector.shape_cast %2 : vector<1x256x128xbf16> to vector<256x128xbf16>
    %c0_5 = arith.constant 0 : index
    %c0_6 = arith.constant 0 : index
    %c0_7 = arith.constant 0 : index
    %4 = vector.load %arg3[%c0_5, %c0_6, %c0_7] : memref<4x128x128xbf16, #tpu.memory_space<vmem>>, vector<1x128x128xbf16>
    %5 = vector.shape_cast %4 : vector<1x128x128xbf16> to vector<128x128xbf16>
    %cst = arith.constant dense<0.000000e+00> : vector<256x128xf32>
    %6 = tpu.matmul %3, %5, %cst {dimension_numbers = #tpu.dot_dimension_numbers<[1], [0], [0], [1], [0, 0, 1, 1], [], []>} : vector<256x128xbf16>, vector<128x128xbf16>, vector<256x128xf32> -> vector<256x128xf32>
    %7 = arith.truncf %6 : vector<256x128xf32> to vector<256x128xbf16>
    %cst_8 = arith.constant dense<0.000000e+00> : vector<256x128xf32>
    %8 = tpu.matmul %1, %7, %cst_8 {dimension_numbers = #tpu.dot_dimension_numbers<[1], [0], [0], [1], [0, 0, 1, 1], [], []>} : vector<256x256xbf16>, vector<256x128xbf16>, vector<256x128xf32> -> vector<256x128xf32>
    %c0_9 = arith.constant 0 : index
    %c0_10 = arith.constant 0 : index
    %c0_11 = arith.constant 0 : index
    %9 = vector.load %arg4[%c0_9, %c0_10, %c0_11] : memref<4x1x128xf32, #tpu.memory_space<vmem>>, vector<1x1x128xf32>
    %10 = vector.shape_cast %9 : vector<1x1x128xf32> to vector<1x128xf32>
    %11 = vector.broadcast %10 : vector<1x128xf32> to vector<256x128xf32>
    %12 = arith.addf %8, %11 : vector<256x128xf32>
    %cst_12 = arith.constant 0.000000e+00 : f32
    %13 = vector.broadcast %cst_12 : f32 to vector<256x128xf32>
    %14 = arith.maximumf %12, %13 : vector<256x128xf32>
    %15 = arith.truncf %14 : vector<256x128xf32> to vector<256x128xbf16>
    %c1 = arith.constant 1 : index
    %c0_13 = arith.constant 0 : index
    %c0_14 = arith.constant 0 : index
    %16 = vector.load %arg3[%c1, %c0_13, %c0_14] : memref<4x128x128xbf16, #tpu.memory_space<vmem>>, vector<1x128x128xbf16>
    %17 = vector.shape_cast %16 : vector<1x128x128xbf16> to vector<128x128xbf16>
    %cst_15 = arith.constant dense<0.000000e+00> : vector<256x128xf32>
    %18 = tpu.matmul %15, %17, %cst_15 {dimension_numbers = #tpu.dot_dimension_numbers<[1], [0], [0], [1], [0, 0, 1, 1], [], []>} : vector<256x128xbf16>, vector<128x128xbf16>, vector<256x128xf32> -> vector<256x128xf32>
    %19 = arith.truncf %18 : vector<256x128xf32> to vector<256x128xbf16>
    %cst_16 = arith.constant dense<0.000000e+00> : vector<256x128xf32>
    %20 = tpu.matmul %1, %19, %cst_16 {dimension_numbers = #tpu.dot_dimension_numbers<[1], [0], [0], [1], [0, 0, 1, 1], [], []>} : vector<256x256xbf16>, vector<256x128xbf16>, vector<256x128xf32> -> vector<256x128xf32>
    %c1_17 = arith.constant 1 : index
    %c0_18 = arith.constant 0 : index
    %c0_19 = arith.constant 0 : index
    %21 = vector.load %arg4[%c1_17, %c0_18, %c0_19] : memref<4x1x128xf32, #tpu.memory_space<vmem>>, vector<1x1x128xf32>
    %22 = vector.shape_cast %21 : vector<1x1x128xf32> to vector<1x128xf32>
    %23 = vector.broadcast %22 : vector<1x128xf32> to vector<256x128xf32>
    %24 = arith.addf %20, %23 : vector<256x128xf32>
    %cst_20 = arith.constant 0.000000e+00 : f32
    %25 = vector.broadcast %cst_20 : f32 to vector<256x128xf32>
    %26 = arith.maximumf %24, %25 : vector<256x128xf32>
    %27 = arith.truncf %26 : vector<256x128xf32> to vector<256x128xbf16>
    %c2 = arith.constant 2 : index
    %c0_21 = arith.constant 0 : index
    %c0_22 = arith.constant 0 : index
    %28 = vector.load %arg3[%c2, %c0_21, %c0_22] : memref<4x128x128xbf16, #tpu.memory_space<vmem>>, vector<1x128x128xbf16>
    %29 = vector.shape_cast %28 : vector<1x128x128xbf16> to vector<128x128xbf16>
    %cst_23 = arith.constant dense<0.000000e+00> : vector<256x128xf32>
    %30 = tpu.matmul %27, %29, %cst_23 {dimension_numbers = #tpu.dot_dimension_numbers<[1], [0], [0], [1], [0, 0, 1, 1], [], []>} : vector<256x128xbf16>, vector<128x128xbf16>, vector<256x128xf32> -> vector<256x128xf32>
    %31 = arith.truncf %30 : vector<256x128xf32> to vector<256x128xbf16>
    %cst_24 = arith.constant dense<0.000000e+00> : vector<256x128xf32>
    %32 = tpu.matmul %1, %31, %cst_24 {dimension_numbers = #tpu.dot_dimension_numbers<[1], [0], [0], [1], [0, 0, 1, 1], [], []>} : vector<256x256xbf16>, vector<256x128xbf16>, vector<256x128xf32> -> vector<256x128xf32>
    %c2_25 = arith.constant 2 : index
    %c0_26 = arith.constant 0 : index
    %c0_27 = arith.constant 0 : index
    %33 = vector.load %arg4[%c2_25, %c0_26, %c0_27] : memref<4x1x128xf32, #tpu.memory_space<vmem>>, vector<1x1x128xf32>
    %34 = vector.shape_cast %33 : vector<1x1x128xf32> to vector<1x128xf32>
    %35 = vector.broadcast %34 : vector<1x128xf32> to vector<256x128xf32>
    %36 = arith.addf %32, %35 : vector<256x128xf32>
    %cst_28 = arith.constant 0.000000e+00 : f32
    %37 = vector.broadcast %cst_28 : f32 to vector<256x128xf32>
    %38 = arith.maximumf %36, %37 : vector<256x128xf32>
    %39 = arith.truncf %38 : vector<256x128xf32> to vector<256x128xbf16>
    %c3 = arith.constant 3 : index
    %c0_29 = arith.constant 0 : index
    %c0_30 = arith.constant 0 : index
    %40 = vector.load %arg3[%c3, %c0_29, %c0_30] : memref<4x128x128xbf16, #tpu.memory_space<vmem>>, vector<1x128x128xbf16>
    %41 = vector.shape_cast %40 : vector<1x128x128xbf16> to vector<128x128xbf16>
    %cst_31 = arith.constant dense<0.000000e+00> : vector<256x128xf32>
    %42 = tpu.matmul %39, %41, %cst_31 {dimension_numbers = #tpu.dot_dimension_numbers<[1], [0], [0], [1], [0, 0, 1, 1], [], []>} : vector<256x128xbf16>, vector<128x128xbf16>, vector<256x128xf32> -> vector<256x128xf32>
    %43 = arith.truncf %42 : vector<256x128xf32> to vector<256x128xbf16>
    %cst_32 = arith.constant dense<0.000000e+00> : vector<256x128xf32>
    %44 = tpu.matmul %1, %43, %cst_32 {dimension_numbers = #tpu.dot_dimension_numbers<[1], [0], [0], [1], [0, 0, 1, 1], [], []>} : vector<256x256xbf16>, vector<256x128xbf16>, vector<256x128xf32> -> vector<256x128xf32>
    %c3_33 = arith.constant 3 : index
    %c0_34 = arith.constant 0 : index
    %c0_35 = arith.constant 0 : index
    %45 = vector.load %arg4[%c3_33, %c0_34, %c0_35] : memref<4x1x128xf32, #tpu.memory_space<vmem>>, vector<1x1x128xf32>
    %46 = vector.shape_cast %45 : vector<1x1x128xf32> to vector<1x128xf32>
    %47 = vector.broadcast %46 : vector<1x128xf32> to vector<256x128xf32>
    %48 = arith.addf %44, %47 : vector<256x128xf32>
    %cst_36 = arith.constant 0.000000e+00 : f32
    %49 = vector.broadcast %cst_36 : f32 to vector<256x128xf32>
    %50 = arith.maximumf %48, %49 : vector<256x128xf32>
    %51 = arith.truncf %50 : vector<256x128xf32> to vector<256x128xbf16>
    %52 = arith.extf %51 : vector<256x128xbf16> to vector<256x128xf32>
    %53 = vector.shape_cast %52 : vector<256x128xf32> to vector<16x16x128xf32>
    %54 = tpu.iota {dimensions = array<i32: 1>} : vector<16x16x128xi32>
    %c16_i32 = arith.constant 16 : i32
    %55 = vector.broadcast %c16_i32 : i32 to vector<16x16x128xi32>
    %56 = arith.cmpi slt, %54, %55 : vector<16x16x128xi32>
    %cst_37 = arith.constant 6.250000e-02 : f32
    %cst_38 = arith.constant 0.000000e+00 : f32
    %57 = vector.broadcast %cst_37 : f32 to vector<16x16x128xf32>
    %58 = vector.broadcast %cst_38 : f32 to vector<16x16x128xf32>
    %59 = arith.select %56, %57, %58 : vector<16x16x128xi1>, vector<16x16x128xf32>
    %60 = arith.mulf %53, %59 : vector<16x16x128xf32>
    %cst_39 = arith.constant dense<0.000000e+00> : vector<16x128xf32>
    %61 = vector.multi_reduction <add>, %60, %cst_39 [1] : vector<16x16x128xf32> to vector<16x128xf32>
    %62 = arith.truncf %61 : vector<16x128xf32> to vector<16x128xbf16>
    %c0_40 = arith.constant 0 : index
    %c0_41 = arith.constant 0 : index
    %c0_42 = arith.constant 0 : index
    %63 = vector.load %arg5[%c0_40, %c0_41, %c0_42] : memref<2x128x128xbf16, #tpu.memory_space<vmem>>, vector<1x128x128xbf16>
    %64 = vector.shape_cast %63 : vector<1x128x128xbf16> to vector<128x128xbf16>
    %cst_43 = arith.constant dense<0.000000e+00> : vector<16x128xf32>
    %65 = tpu.matmul %62, %64, %cst_43 {dimension_numbers = #tpu.dot_dimension_numbers<[1], [0], [0], [1], [0, 0, 1, 1], [], []>} : vector<16x128xbf16>, vector<128x128xbf16>, vector<16x128xf32> -> vector<16x128xf32>
    %c0_44 = arith.constant 0 : index
    %c0_45 = arith.constant 0 : index
    %c0_46 = arith.constant 0 : index
    %66 = vector.load %arg6[%c0_44, %c0_45, %c0_46] : memref<2x1x128xf32, #tpu.memory_space<vmem>>, vector<1x1x128xf32>
    %67 = vector.shape_cast %66 : vector<1x1x128xf32> to vector<1x128xf32>
    %68 = vector.broadcast %67 : vector<1x128xf32> to vector<16x128xf32>
    %69 = arith.addf %65, %68 : vector<16x128xf32>
    %cst_47 = arith.constant 0.000000e+00 : f32
    %70 = vector.broadcast %cst_47 : f32 to vector<16x128xf32>
    %71 = arith.maximumf %69, %70 : vector<16x128xf32>
    %72 = arith.truncf %71 : vector<16x128xf32> to vector<16x128xbf16>
    %c1_48 = arith.constant 1 : index
    %c0_49 = arith.constant 0 : index
    %c0_50 = arith.constant 0 : index
    %73 = vector.load %arg5[%c1_48, %c0_49, %c0_50] : memref<2x128x128xbf16, #tpu.memory_space<vmem>>, vector<1x128x128xbf16>
    %74 = vector.shape_cast %73 : vector<1x128x128xbf16> to vector<128x128xbf16>
    %cst_51 = arith.constant dense<0.000000e+00> : vector<16x128xf32>
    %75 = tpu.matmul %72, %74, %cst_51 {dimension_numbers = #tpu.dot_dimension_numbers<[1], [0], [0], [1], [0, 0, 1, 1], [], []>} : vector<16x128xbf16>, vector<128x128xbf16>, vector<16x128xf32> -> vector<16x128xf32>
    %c1_52 = arith.constant 1 : index
    %c0_53 = arith.constant 0 : index
    %c0_54 = arith.constant 0 : index
    %76 = vector.load %arg6[%c1_52, %c0_53, %c0_54] : memref<2x1x128xf32, #tpu.memory_space<vmem>>, vector<1x1x128xf32>
    %77 = vector.shape_cast %76 : vector<1x1x128xf32> to vector<1x128xf32>
    %78 = vector.broadcast %77 : vector<1x128xf32> to vector<16x128xf32>
    %79 = arith.addf %75, %78 : vector<16x128xf32>
    %c0_55 = arith.constant 0 : index
    %c0_56 = arith.constant 0 : index
    %c0_57 = arith.constant 0 : index
    %80 = vector.load %arg7[%c0_55, %c0_56, %c0_57] : memref<1x16x128xf32, #tpu.memory_space<vmem>>, vector<1x16x128xf32>
    %81 = vector.shape_cast %80 : vector<1x16x128xf32> to vector<16x128xf32>
    %82 = vector.shape_cast %79 : vector<16x128xf32> to vector<1x16x128xf32>
    tpu.vector_store %arg7[%c0_55, %c0_56, %c0_57], %82 {strides = array<i32>} : memref<1x16x128xf32, #tpu.memory_space<vmem>>, vector<1x16x128xf32>,
    return
  }
  func.func @transform_0(%arg0: i32) -> (i32, i32, i32) {
    %c0_i32 = arith.constant 0 : i32
    %c0_i32_0 = arith.constant 0 : i32
    %c0_i32_1 = arith.constant 0 : i32
    return %arg0, %c0_i32, %c0_i32_0 : i32, i32, i32
  }
  func.func @transform_1(%arg0: i32) -> (i32, i32, i32) {
    %c0_i32 = arith.constant 0 : i32
    %c0_i32_0 = arith.constant 0 : i32
    %c0_i32_1 = arith.constant 0 : i32
    return %arg0, %c0_i32, %c0_i32_0 : i32, i32, i32
  }
  func.func @transform_2(%arg0: i32) -> (i32, i32, i32) {
    %c0_i32 = arith.constant 0 : i32
    %c0_i32_0 = arith.constant 0 : i32
    %c0_i32_1 = arith.constant 0 : i32
    %c0_i32_2 = arith.constant 0 : i32
    return %c0_i32, %c0_i32_0, %c0_i32_1 : i32, i32, i32
  }
  func.func @transform_3(%arg0: i32) -> (i32, i32, i32) {
    %c0_i32 = arith.constant 0 : i32
    %c0_i32_0 = arith.constant 0 : i32
    %c0_i32_1 = arith.constant 0 : i32
    %c0_i32_2 = arith.constant 0 : i32
    return %c0_i32, %c0_i32_0, %c0_i32_1 : i32, i32, i32
  }
  func.func @transform_4(%arg0: i32) -> (i32, i32, i32) {
    %c0_i32 = arith.constant 0 : i32
    %c0_i32_0 = arith.constant 0 : i32
    %c0_i32_1 = arith.constant 0 : i32
    %c0_i32_2 = arith.constant 0 : i32
    return %c0_i32, %c0_i32_0, %c0_i32_1 : i32, i32, i32
  }
  func.func @transform_5(%arg0: i32) -> (i32, i32, i32) {
    %c0_i32 = arith.constant 0 : i32
    %c0_i32_0 = arith.constant 0 : i32
    %c0_i32_1 = arith.constant 0 : i32
    %c0_i32_2 = arith.constant 0 : i32
    return %c0_i32, %c0_i32_0, %c0_i32_1 : i32, i32, i32
  }
  func.func @transform_6(%arg0: i32) -> (i32, i32, i32) {
    %c0_i32 = arith.constant 0 : i32
    %c0_i32_0 = arith.constant 0 : i32
    %c0_i32_1 = arith.constant 0 : i32
    return %arg0, %c0_i32, %c0_i32_0 : i32, i32, i32
  }
}

</mosaic_0001>

<llo_original>
// kernel: tpu_custom_call.1
$region0: #{tpu_custom_call.1}
  #allocation0 [shape = 'u32[]', space=smem, size = 0x4, offset = 0x4, fixed_abs, tag = 'smem constant byte address 0x4 - core index']
  #allocation1 [shape = 'u32[72,128]{1,0:T(1,128)}', space=vmem, size = 0x9000, scoped, tag = 'internal scratch']
  %s0 = inlined_call_operand.hbm [shape: bf16[8,256,128], index: 0, kind: input, shape index: {}]
  %s1 = inlined_call_operand.hbm [shape: bf16[8,256,256], index: 1, kind: input, shape index: {}]
  %s2 = inlined_call_operand.hbm [shape: bf16[4,128,128], index: 2, kind: input, shape index: {}]
  %s3 = inlined_call_operand.hbm [shape: f32[4,1,128], index: 3, kind: input, shape index: {}]
  %s4 = inlined_call_operand.hbm [shape: bf16[2,128,128], index: 4, kind: input, shape index: {}]
  %s5 = inlined_call_operand.vmem [shape: f32[2,1,128], index: 5, kind: input, shape index: {}]
  %s6 = inlined_call_operand.hbm [shape: f32[8,16,128], index: 6, kind: output, shape index: {}]
  %s7 = sld [smem:[#allocation0]]
  $region77: #{tpu_custom_call.1} parent=0
    _
  %s9 = ssub.s32 1, %s7
  %s10 = scalar_select 0, %s9, %s7
  $region1: #{tpu_custom_call.1} parent=0
    #allocation2 [shape = 'u8[131072]{0}', space=vmem, size = 0x20000, scoped, tag = 'input window, operand 0']
    #allocation3 [shape = 's32[2]{0}', space=sflag, size = 0x8, scoped, tag = 'scoped memory for tpu_custom_call.1']
    #allocation4 [shape = 's32[2]{0}', space=sflag, size = 0x8, scoped, tag = 'scoped memory for tpu_custom_call.1']
    #allocation5 [shape = 'u8[262144]{0}', space=vmem, size = 0x40000, scoped, tag = 'input window, operand 1']
    #allocation6 [shape = 's32[2]{0}', space=sflag, size = 0x8, scoped, tag = 'scoped memory for tpu_custom_call.1']
    #allocation7 [shape = 'u8[131072]{0}', space=vmem, size = 0x20000, scoped, tag = 'input window, operand 2, single buffered']
    #allocation8 [shape = 'u8[2048]{0}', space=vmem, size = 0x800, scoped, tag = 'input window, operand 3, single buffered']
    #allocation9 [shape = 's32[1]{0}', space=sflag, size = 0x4, scoped, tag = 'scoped memory for tpu_custom_call.1']
    #allocation10 [shape = 'u8[65536]{0}', space=vmem, size = 0x10000, scoped, tag = 'input window, operand 4, single buffered']
    #allocation11 [shape = 'u8[16384]{0}', space=vmem, size = 0x4000, scoped, tag = 'output window, operand 0']
    %11 = vsyncpa [#allocation3], 0
    %s12 = scalar_lea.sflag [#allocation3], 1
    %13 = vsyncpa %s12, 0
    %14 = vsyncpa [#allocation6], 0
    %s15 = scalar_lea.sflag [#allocation6], 1
    %16 = vsyncpa %s15, 0
    %17 = vsyncpa [#allocation9], 0
    %18 = vsyncpa [#allocation4], 0
    %s19 = scalar_lea.sflag [#allocation4], 1
    %20 = vsyncpa %s19, 0
    loop: start=0, step=1, limit=10
    $region2: #{tpu_custom_call.1} parent=1 // loop_pre_header
      _
    $region3: #{tpu_custom_call.1} parent=1 // loop_header
      %s22 = sphi 0, %s26
      %p23 = scmp.ge.s32.totalorder %s22, 10
      %s32 = sphi 0, %s34
      %s35 = sphi 0, %s32
      %s36 = sphi 0, %s35
      %s52 = sphi 0, %s36
      %s58 = sphi 0, %s60
      %s61 = sphi 0, %s58
      %s62 = sphi 0, %s61
      %s78 = sphi 0, %s62
      %s82 = sphi 0, %s82
      %s84 = sphi 0, %s82
      %s85 = sphi 0, %s84
      %s99 = sphi 0, %s85
      %s103 = sphi 0, %s103
      %s105 = sphi 0, %s103
      %s106 = sphi 0, %s105
      %s120 = sphi 0, %s106
      %s124 = sphi 0, %s124
      %s126 = sphi 0, %s124
      %s127 = sphi 0, %s126
      %s141 = sphi 0, %s127
      %s145 = sphi 0, %s145
      %s147 = sphi 0, %s145
      %s148 = sphi 0, %s147
      %s162 = sphi 0, %s148
      %s168 = sphi 0, %s170
      %s171 = sphi 0, %s168
      %s172 = sphi 0, %s171
      %s188 = sphi 0, %s172
    $region4: #{tpu_custom_call.1} parent=1 // loop_header_branch
      %25 = sbr.rel (%p23) target = $region8
    $region5: #{tpu_custom_call.1} parent=1 // loop_body
      %s27 = ssub.s32 %s22, 1
      %s28 = ssub.s32 %s22, 2
      %s29 = sadd.s32 %s22, 1
      %s30 = ssub.s32 %s22, %s29
      %p31 = scmp.eq.s32.totalorder %s30, 0
      %s33 = sadd.s32 %s32, 1
      %s34 = scalar_select %p31, %s32, %s33
      %p37 = pneg %p31
      %p38 = scmp.eq.s32.totalorder %s22, 7
      %p39 = por %p37, %p38
      %p40 = scmp.ne.s32.totalorder %s32, %s35
      %p41 = scmp.eq.s32.totalorder %s22, 0
      %p42 = por %p40, %p41
      %p43 = scmp.ne.s32.totalorder %s32, %s35
      %p44 = scmp.eq.s32.totalorder %s27, 7
      %p45 = por %p43, %p44
      %p46 = scmp.ne.s32.totalorder %s35, %s36
      %p47 = scmp.eq.s32.totalorder %s27, 0
      %p48 = por %p46, %p47
      %p49 = scmp.ne.s32.totalorder %s35, %s36
      %p50 = scmp.eq.s32.totalorder %s28, 7
      %p51 = por %p49, %p50
      %p53 = scmp.ne.s32.totalorder %s36, %s52
      %p54 = scmp.eq.s32.totalorder %s28, 0
      %p55 = por %p53, %p54
      %s56 = ssub.s32 %s22, %s29
      %p57 = scmp.eq.s32.totalorder %s56, 0
      %s59 = sadd.s32 %s58, 1
      %s60 = scalar_select %p57, %s58, %s59
      %p63 = pneg %p57
      %p64 = scmp.eq.s32.totalorder %s22, 7
      %p65 = por %p63, %p64
      %p66 = scmp.ne.s32.totalorder %s58, %s61
      %p67 = scmp.eq.s32.totalorder %s22, 0
      %p68 = por %p66, %p67
      %p69 = scmp.ne.s32.totalorder %s58, %s61
      %p70 = scmp.eq.s32.totalorder %s27, 7
      %p71 = por %p69, %p70
      %p72 = scmp.ne.s32.totalorder %s61, %s62
      %p73 = scmp.eq.s32.totalorder %s27, 0
      %p74 = por %p72, %p73
      %p75 = scmp.ne.s32.totalorder %s61, %s62
      %p76 = scmp.eq.s32.totalorder %s28, 7
      %p77 = por %p75, %p76
      %p79 = scmp.ne.s32.totalorder %s62, %s78
      %p80 = scmp.eq.s32.totalorder %s28, 0
      %p81 = por %p79, %p80
      %s83 = sadd.s32 %s82, 1
      %p86 = scmp.eq.s32.totalorder %s22, 7
      %p87 = scmp.ne.s32.totalorder %s82, %s84
      %p88 = scmp.eq.s32.totalorder %s22, 0
      %p89 = por %p87, %p88
      %p90 = scmp.ne.s32.totalorder %s82, %s84
      %p91 = scmp.eq.s32.totalorder %s27, 7
      %p92 = por %p90, %p91
      %p93 = scmp.ne.s32.totalorder %s84, %s85
      %p94 = scmp.eq.s32.totalorder %s27, 0
      %p95 = por %p93, %p94
      %p96 = scmp.ne.s32.totalorder %s84, %s85
      %p97 = scmp.eq.s32.totalorder %s28, 7
      %p98 = por %p96, %p97
      %p100 = scmp.ne.s32.totalorder %s85, %s99
      %p101 = scmp.eq.s32.totalorder %s28, 0
      %p102 = por %p100, %p101
      %s104 = sadd.s32 %s103, 1
      %p107 = scmp.eq.s32.totalorder %s22, 7
      %p108 = scmp.ne.s32.totalorder %s103, %s105
      %p109 = scmp.eq.s32.totalorder %s22, 0
      %p110 = por %p108, %p109
      %p111 = scmp.ne.s32.totalorder %s103, %s105
      %p112 = scmp.eq.s32.totalorder %s27, 7
      %p113 = por %p111, %p112
      %p114 = scmp.ne.s32.totalorder %s105, %s106
      %p115 = scmp.eq.s32.totalorder %s27, 0
      %p116 = por %p114, %p115
      %p117 = scmp.ne.s32.totalorder %s105, %s106
      %p118 = scmp.eq.s32.totalorder %s28, 7
      %p119 = por %p117, %p118
      %p121 = scmp.ne.s32.totalorder %s106, %s120
      %p122 = scmp.eq.s32.totalorder %s28, 0
      %p123 = por %p121, %p122
      %s125 = sadd.s32 %s124, 1
      %p128 = scmp.eq.s32.totalorder %s22, 7
      %p129 = scmp.ne.s32.totalorder %s124, %s126
      %p130 = scmp.eq.s32.totalorder %s22, 0
      %p131 = por %p129, %p130
      %p132 = scmp.ne.s32.totalorder %s124, %s126
      %p133 = scmp.eq.s32.totalorder %s27, 7
      %p134 = por %p132, %p133
      %p135 = scmp.ne.s32.totalorder %s126, %s127
      %p136 = scmp.eq.s32.totalorder %s27, 0
      %p137 = por %p135, %p136
      %p138 = scmp.ne.s32.totalorder %s126, %s127
      %p139 = scmp.eq.s32.totalorder %s28, 7
      %p140 = por %p138, %p139
      %p142 = scmp.ne.s32.totalorder %s127, %s141
      %p143 = scmp.eq.s32.totalorder %s28, 0
      %p144 = por %p142, %p143
      %s146 = sadd.s32 %s145, 1
      %p149 = scmp.eq.s32.totalorder %s22, 7
      %p150 = scmp.ne.s32.totalorder %s145, %s147
      %p151 = scmp.eq.s32.totalorder %s22, 0
      %p152 = por %p150, %p151
      %p153 = scmp.ne.s32.totalorder %s145, %s147
      %p154 = scmp.eq.s32.totalorder %s27, 7
      %p155 = por %p153, %p154
      %p156 = scmp.ne.s32.totalorder %s147, %s148
      %p157 = scmp.eq.s32.totalorder %s27, 0
      %p158 = por %p156, %p157
      %p159 = scmp.ne.s32.totalorder %s147, %s148
      %p160 = scmp.eq.s32.totalorder %s28, 7
      %p161 = por %p159, %p160
      %p163 = scmp.ne.s32.totalorder %s148, %s162
      %p164 = scmp.eq.s32.totalorder %s28, 0
      %p165 = por %p163, %p164
      %s166 = ssub.s32 %s22, %s29
      %p167 = scmp.eq.s32.totalorder %s166, 0
      %s169 = sadd.s32 %s168, 1
      %s170 = scalar_select %p167, %s168, %s169
      %p173 = pneg %p167
      %p174 = scmp.eq.s32.totalorder %s22, 7
      %p175 = por %p173, %p174
      %p176 = scmp.ne.s32.totalorder %s168, %s171
      %p177 = scmp.eq.s32.totalorder %s22, 0
      %p178 = por %p176, %p177
      %p179 = scmp.ne.s32.totalorder %s168, %s171
      %p180 = scmp.eq.s32.totalorder %s27, 7
      %p181 = por %p179, %p180
      %p182 = scmp.ne.s32.totalorder %s171, %s172
      %p183 = scmp.eq.s32.totalorder %s27, 0
      %p184 = por %p182, %p183
      %p185 = scmp.ne.s32.totalorder %s171, %s172
      %p186 = scmp.eq.s32.totalorder %s28, 7
      %p187 = por %p185, %p186
      %p189 = scmp.ne.s32.totalorder %s172, %s188
      %p190 = scmp.eq.s32.totalorder %s28, 0
      %p191 = por %p189, %p190
      %p192 = scmp.le.s32.totalorder 1, %s22
      %p193 = scmp.lt.s32.totalorder %s22, 9
      %p194 = pnand %p192, %p193
      %p195 = pneg %p194
      // Predicated region
      $region9: #{tpu_custom_call.1} parent=5 // pred_check
        _
      $region10: #{tpu_custom_call.1} parent=5 // pred_check_branch
        %197 = sbr.rel (%p194) target = $region12
      $region11: #{tpu_custom_call.1} parent=5 // pred_region
        %s198 = ssub.s32 %s22, 1
        // Predicated region
        $region13: #{tpu_custom_call.1} parent=11 // pred_check
          %p199 = pneg %p95
        $region14: #{tpu_custom_call.1} parent=11 // pred_check_branch
          %201 = sbr.rel (%p199) target = $region16
        $region15: #{tpu_custom_call.1} parent=11 // pred_region
          %203 = vsyncadd [#allocation6], 0
          %s204 = sshll.u32 %s2, 4
          %s205 = int_to_ptr.hbm [resolvable:$true] %s204
          %s206 = sshll.u32 [#allocation7], 4
          %s207 = int_to_ptr.vmem [resolvable:$true] %s206
          %212 = dma.hbm_to_vmem [thread:$0]  %s205, 4096, %s207, [#allocation6], 64, 64, 4
        $region16: #{tpu_custom_call.1} parent=11 // pred_fallthru
          _
        // Predicated region
        $region17: #{tpu_custom_call.1} parent=11 // pred_check
          %p213 = pneg %p116
        $region18: #{tpu_custom_call.1} parent=11 // pred_check_branch
          %215 = sbr.rel (%p213) target = $region20
        $region19: #{tpu_custom_call.1} parent=11 // pred_region
          %217 = vsyncadd [#allocation9], 0
          %s218 = sshll.u32 %s3, 4
          %s219 = int_to_ptr.hbm [resolvable:$true] %s218
          %s220 = sshll.u32 [#allocation8], 4
          %s221 = int_to_ptr.vmem [resolvable:$true] %s220
          %226 = dma.hbm_to_vmem [thread:$0]  %s219, 64, %s221, [#allocation9], 16, 16, 1
        $region20: #{tpu_custom_call.1} parent=11 // pred_fallthru
          _
        // Predicated region
        $region21: #{tpu_custom_call.1} parent=11 // pred_check
          %p227 = pneg %p137
        $region22: #{tpu_custom_call.1} parent=11 // pred_check_branch
          %229 = sbr.rel (%p227) target = $region24
        $region23: #{tpu_custom_call.1} parent=11 // pred_region
          %231 = vsyncadd [#allocation9], 0
          %s232 = sshll.u32 %s4, 4
          %s233 = int_to_ptr.hbm [resolvable:$true] %s232
          %s234 = sshll.u32 [#allocation10], 4
          %s235 = int_to_ptr.vmem [resolvable:$true] %s234
          %240 = dma.hbm_to_vmem [thread:$0]  %s233, 2048, %s235, [#allocation9], 64, 64, 4
        $region24: #{tpu_custom_call.1} parent=11 // pred_fallthru
          _
        // Predicated region
        $region25: #{tpu_custom_call.1} parent=11 // pred_check
          %p241 = pneg %p158
        $region26: #{tpu_custom_call.1} parent=11 // pred_check_branch
          %243 = sbr.rel (%p241) target = $region28
        $region27: #{tpu_custom_call.1} parent=11 // pred_region
          _
        $region28: #{tpu_custom_call.1} parent=11 // pred_fallthru
          _
      $region12: #{tpu_custom_call.1} parent=5 // pred_fallthru
        _
      %p244 = scmp.lt.s32.totalorder %s22, 8
      // Predicated region
      $region29: #{tpu_custom_call.1} parent=5 // pred_check
        %p245 = pneg %p244
      $region30: #{tpu_custom_call.1} parent=5 // pred_check_branch
        %247 = sbr.rel (%p245) target = $region32
      $region31: #{tpu_custom_call.1} parent=5 // pred_region
        // Predicated region
        $region33: #{tpu_custom_call.1} parent=31 // pred_check
          %p248 = pneg %p42
        $region34: #{tpu_custom_call.1} parent=31 // pred_check_branch
          %250 = sbr.rel (%p248) target = $region36
        $region35: #{tpu_custom_call.1} parent=31 // pred_region
          %s251 = sand.u32 %s32, 1
          %s252 = scalar_lea.sflag [#allocation3], %s251
          %s253 = sand.u32 %s32, 1
          %s254 = smul.addr %s253, 128
          %s255 = scalar_lea.vmem [#allocation2], %s254
          %257 = vsyncadd %s252, 0
          %s258 = smul.addr %s22, 32
          %s259 = smul.addr %s258, 4
          %s260 = scalar_lea.hbm %s0, %s259
          %s261 = sshll.u32 %s260, 4
          %s262 = int_to_ptr.hbm [resolvable:$true] %s261
          %s263 = sshll.u32 %s255, 4
          %s264 = int_to_ptr.vmem [resolvable:$true] %s263
          %269 = dma.hbm_to_vmem [thread:$0]  %s262, 2048, %s264, %s252, 64, 64, 4
        $region36: #{tpu_custom_call.1} parent=31 // pred_fallthru
          _
        // Predicated region
        $region37: #{tpu_custom_call.1} parent=31 // pred_check
          %p270 = pneg %p68
        $region38: #{tpu_custom_call.1} parent=31 // pred_check_branch
          %272 = sbr.rel (%p270) target = $region40
        $region39: #{tpu_custom_call.1} parent=31 // pred_region
          %s273 = sand.u32 %s22, 1
          %s274 = scalar_lea.sflag [#allocation6], %s273
          %s275 = sand.u32 %s58, 1
          %s276 = smul.addr %s275, 256
          %s277 = scalar_lea.vmem [#allocation5], %s276
          %279 = vsyncadd %s274, 0
          %s280 = smul.addr %s22, 64
          %s281 = smul.addr %s280, 4
          %s282 = scalar_lea.hbm %s1, %s281
          %s283 = sshll.u32 %s282, 4
          %s284 = int_to_ptr.hbm [resolvable:$true] %s283
          %s285 = sshll.u32 %s277, 4
          %s286 = int_to_ptr.vmem [resolvable:$true] %s285
          %291 = dma.hbm_to_vmem [thread:$0]  %s284, 4096, %s286, %s274, 128, 128, 8
        $region40: #{tpu_custom_call.1} parent=31 // pred_fallthru
          _
      $region32: #{tpu_custom_call.1} parent=5 // pred_fallthru
        _
      %p292 = scmp.le.s32.totalorder 1, %s22
      %p293 = scmp.lt.s32.totalorder %s22, 9
      %p294 = pnand %p292, %p293
      %p295 = pneg %p294
      // Predicated region
      $region41: #{tpu_custom_call.1} parent=5 // pred_check
        _
      $region42: #{tpu_custom_call.1} parent=5 // pred_check_branch
        %297 = sbr.rel (%p294) target = $region44
      $region43: #{tpu_custom_call.1} parent=5 // pred_region
        %s298 = ssub.s32 %s22, 1
        %s299 = sand.u32 %s35, 1
        %s300 = scalar_lea.sflag [#allocation3], %s299
        %s301 = sand.u32 %s35, 1
        %s302 = smul.addr %s301, 128
        %s303 = scalar_lea.vmem [#allocation2], %s302
        // Predicated region
        $region45: #{tpu_custom_call.1} parent=43 // pred_check
          %p304 = pneg %p48
        $region46: #{tpu_custom_call.1} parent=43 // pred_check_branch
          %306 = sbr.rel (%p304) target = $region48
        $region47: #{tpu_custom_call.1} parent=43 // pred_region
          %308 = dma.done %s300, 2048
        $region48: #{tpu_custom_call.1} parent=43 // pred_fallthru
          _
        %s309 = sand.u32 %s27, 1
        %s310 = scalar_lea.sflag [#allocation6], %s309
        %s311 = sand.u32 %s61, 1
        %s312 = smul.addr %s311, 256
        %s313 = scalar_lea.vmem [#allocation5], %s312
        // Predicated region
        $region49: #{tpu_custom_call.1} parent=43 // pred_check
          %p314 = pneg %p74
        $region50: #{tpu_custom_call.1} parent=43 // pred_check_branch
          %316 = sbr.rel (%p314) target = $region52
        $region51: #{tpu_custom_call.1} parent=43 // pred_region
          %318 = dma.done %s310, 4096
        $region52: #{tpu_custom_call.1} parent=43 // pred_fallthru
          _
        // Predicated region
        $region53: #{tpu_custom_call.1} parent=43 // pred_check
          %p319 = pneg %p95
        $region54: #{tpu_custom_call.1} parent=43 // pred_check_branch
          %321 = sbr.rel (%p319) target = $region56
        $region55: #{tpu_custom_call.1} parent=43 // pred_region
          %323 = dma.done [#allocation6], 4096
        $region56: #{tpu_custom_call.1} parent=43 // pred_fallthru
          _
        // Predicated region
        $region57: #{tpu_custom_call.1} parent=43 // pred_check
          %p324 = pneg %p116
        $region58: #{tpu_custom_call.1} parent=43 // pred_check_branch
          %326 = sbr.rel (%p324) target = $region60
        $region59: #{tpu_custom_call.1} parent=43 // pred_region
          %328 = dma.done [#allocation9], 64
        $region60: #{tpu_custom_call.1} parent=43 // pred_fallthru
          _
        // Predicated region
        $region61: #{tpu_custom_call.1} parent=43 // pred_check
          %p329 = pneg %p137
        $region62: #{tpu_custom_call.1} parent=43 // pred_check_branch
          %331 = sbr.rel (%p329) target = $region64
        $region63: #{tpu_custom_call.1} parent=43 // pred_region
          %333 = dma.done [#allocation9], 2048
        $region64: #{tpu_custom_call.1} parent=43 // pred_fallthru
          _
        %s334 = sand.u32 %s35, 1
        %s335 = scalar_lea.sflag [#allocation3], %s334
        %s336 = sand.u32 %s35, 1
        %s337 = smul.addr %s336, 128
        %s338 = scalar_lea.vmem [#allocation2], %s337
        %p339 = pneg %p48
        %p340 = pneg %p45
        %s341 = sand.u32 %s27, 1
        %s342 = scalar_lea.sflag [#allocation6], %s341
        %s343 = sand.u32 %s61, 1
        %s344 = smul.addr %s343, 256
        %s345 = scalar_lea.vmem [#allocation5], %s344
        %p346 = pneg %p74
        %p347 = pneg %p71
        %p348 = pneg %p95
        %p349 = pneg %p92
        %p350 = pneg %p116
        %p351 = pneg %p113
        %p352 = pneg %p137
        %p353 = pneg %p134
        %p354 = pneg %p158
        %p355 = pneg %p155
        %p356 = pneg %p184
        %p357 = pneg %p181
        %s358 = sand.u32 %s171, 1
        %s359 = scalar_lea.sflag [#allocation4], %s358
        %s360 = sand.u32 %s171, 1
        %s361 = smul.addr %s360, 16
        %s362 = scalar_lea.vmem [#allocation11], %s361
        %v363 = vld [vmem:[%s313] sm:$0xff]
        %v364 = vld [vmem:[%s313 + $0x8] sm:$0xff]
        %v365 = vld [vmem:[%s313 + $0x10] sm:$0xff]
        %v366 = vld [vmem:[%s313 + $0x18] sm:$0xff]
        %v367 = vld [vmem:[%s313 + $0x20] sm:$0xff]
        %v368 = vld [vmem:[%s313 + $0x28] sm:$0xff]
        %v369 = vld [vmem:[%s313 + $0x30] sm:$0xff]
        %v370 = vld [vmem:[%s313 + $0x38] sm:$0xff]
        %v371 = vld [vmem:[%s313 + $0x40] sm:$0xff]
        %v372 = vld [vmem:[%s313 + $0x48] sm:$0xff]
        %v373 = vld [vmem:[%s313 + $0x50] sm:$0xff]
        %v374 = vld [vmem:[%s313 + $0x58] sm:$0xff]
        %v375 = vld [vmem:[%s313 + $0x60] sm:$0xff]
        %v376 = vld [vmem:[%s313 + $0x68] sm:$0xff]
        %v377 = vld [vmem:[%s313 + $0x70] sm:$0xff]
        %v378 = vld [vmem:[%s313 + $0x78] sm:$0xff]
        %v379 = vld [vmem:[%s313 + $0x80] sm:$0xff]
        %v380 = vld [vmem:[%s313 + $0x88] sm:$0xff]
        %v381 = vld [vmem:[%s313 + $0x90] sm:$0xff]
        %v382 = vld [vmem:[%s313 + $0x98] sm:$0xff]
        %v383 = vld [vmem:[%s313 + $0xa0] sm:$0xff]
        %v384 = vld [vmem:[%s313 + $0xa8] sm:$0xff]
        %v385 = vld [vmem:[%s313 + $0xb0] sm:$0xff]
        %v386 = vld [vmem:[%s313 + $0xb8] sm:$0xff]
        %v387 = vld [vmem:[%s313 + $0xc0] sm:$0xff]
        %v388 = vld [vmem:[%s313 + $0xc8] sm:$0xff]
        %v389 = vld [vmem:[%s313 + $0xd0] sm:$0xff]
        %v390 = vld [vmem:[%s313 + $0xd8] sm:$0xff]
        %v391 = vld [vmem:[%s313 + $0xe0] sm:$0xff]
        %v392 = vld [vmem:[%s313 + $0xe8] sm:$0xff]
        %v393 = vld [vmem:[%s313 + $0xf0] sm:$0xff]
        %v394 = vld [vmem:[%s313 + $0xf8] sm:$0xff]
        %v395 = vld [vmem:[%s303] sm:$0xf]
        %v396 = vld [vmem:[%s303 + $0x4] sm:$0xf]
        %v397 = vld [vmem:[%s303 + $0x8] sm:$0xf]
        %v398 = vld [vmem:[%s303 + $0xc] sm:$0xf]
        %v399 = vld [vmem:[%s303 + $0x10] sm:$0xf]
        %v400 = vld [vmem:[%s303 + $0x14] sm:$0xf]
        %v401 = vld [vmem:[%s303 + $0x18] sm:$0xf]
        %v402 = vld [vmem:[%s303 + $0x1c] sm:$0xf]
        %v403 = vld [vmem:[%s303 + $0x20] sm:$0xf]
        %v404 = vld [vmem:[%s303 + $0x24] sm:$0xf]
        %v405 = vld [vmem:[%s303 + $0x28] sm:$0xf]
        %v406 = vld [vmem:[%s303 + $0x2c] sm:$0xf]
        %v407 = vld [vmem:[%s303 + $0x30] sm:$0xf]
        %v408 = vld [vmem:[%s303 + $0x34] sm:$0xf]
        %v409 = vld [vmem:[%s303 + $0x38] sm:$0xf]
        %v410 = vld [vmem:[%s303 + $0x3c] sm:$0xf]
        %v411 = vld [vmem:[%s303 + $0x40] sm:$0xf]
        %v412 = vld [vmem:[%s303 + $0x44] sm:$0xf]
        %v413 = vld [vmem:[%s303 + $0x48] sm:$0xf]
        %v414 = vld [vmem:[%s303 + $0x4c] sm:$0xf]
        %v415 = vld [vmem:[%s303 + $0x50] sm:$0xf]
        %v416 = vld [vmem:[%s303 + $0x54] sm:$0xf]
        %v417 = vld [vmem:[%s303 + $0x58] sm:$0xf]
        %v418 = vld [vmem:[%s303 + $0x5c] sm:$0xf]
        %v419 = vld [vmem:[%s303 + $0x60] sm:$0xf]
        %v420 = vld [vmem:[%s303 + $0x64] sm:$0xf]
        %v421 = vld [vmem:[%s303 + $0x68] sm:$0xf]
        %v422 = vld [vmem:[%s303 + $0x6c] sm:$0xf]
        %v423 = vld [vmem:[%s303 + $0x70] sm:$0xf]
        %v424 = vld [vmem:[%s303 + $0x74] sm:$0xf]
        %v425 = vld [vmem:[%s303 + $0x78] sm:$0xf]
        %v426 = vld [vmem:[%s303 + $0x7c] sm:$0xf]
        %v427 = vld [vmem:[#allocation7] sm:$0xf]
        %v428 = vld [vmem:[#allocation7 + $0x4] sm:$0xf]
        %v429 = vld [vmem:[#allocation7 + $0x8] sm:$0xf]
        %v430 = vld [vmem:[#allocation7 + $0xc] sm:$0xf]
        %v431 = vld [vmem:[#allocation7 + $0x10] sm:$0xf]
        %v432 = vld [vmem:[#allocation7 + $0x14] sm:$0xf]
        %v433 = vld [vmem:[#allocation7 + $0x18] sm:$0xf]
        %v434 = vld [vmem:[#allocation7 + $0x1c] sm:$0xf]
        %v435 = vld [vmem:[#allocation7 + $0x20] sm:$0xf]
        %v436 = vld [vmem:[#allocation7 + $0x24] sm:$0xf]
        %v437 = vld [vmem:[#allocation7 + $0x28] sm:$0xf]
        %v438 = vld [vmem:[#allocation7 + $0x2c] sm:$0xf]
        %v439 = vld [vmem:[#allocation7 + $0x30] sm:$0xf]
        %v440 = vld [vmem:[#allocation7 + $0x34] sm:$0xf]
        %v441 = vld [vmem:[#allocation7 + $0x38] sm:$0xf]
        %v442 = vld [vmem:[#allocation7 + $0x3c] sm:$0xf]
        %v475 = vunpack.c.l.b16 %v395
        %v476 = vunpack.c.l.b16 %v396
        %v477 = vunpack.c.l.b16 %v397
        %v478 = vunpack.c.l.b16 %v398
        %v479 = vunpack.c.l.b16 %v399
        %v480 = vunpack.c.l.b16 %v400
        %v481 = vunpack.c.l.b16 %v401
        %v482 = vunpack.c.l.b16 %v402
        %v483 = vunpack.c.l.b16 %v403
        %v484 = vunpack.c.l.b16 %v404
        %v485 = vunpack.c.l.b16 %v405
        %v486 = vunpack.c.l.b16 %v406
        %v487 = vunpack.c.l.b16 %v407
        %v488 = vunpack.c.l.b16 %v408
        %v489 = vunpack.c.l.b16 %v409
        %v490 = vunpack.c.l.b16 %v410
        %v491 = vunpack.c.l.b16 %v411
        %v492 = vunpack.c.l.b16 %v412
        %v493 = vunpack.c.l.b16 %v413
        %v494 = vunpack.c.l.b16 %v414
        %v495 = vunpack.c.l.b16 %v415
        %v496 = vunpack.c.l.b16 %v416
        %v497 = vunpack.c.l.b16 %v417
        %v498 = vunpack.c.l.b16 %v418
        %v499 = vunpack.c.l.b16 %v419
        %v500 = vunpack.c.l.b16 %v420
        %v501 = vunpack.c.l.b16 %v421
        %v502 = vunpack.c.l.b16 %v422
        %v503 = vunpack.c.l.b16 %v423
        %v504 = vunpack.c.l.b16 %v424
        %v505 = vunpack.c.l.b16 %v425
        %v506 = vunpack.c.l.b16 %v426
        %v507 = vpack.c.b16 %v476, %v475
        %v508 = vpack.c.b16 %v478, %v477
        %v509 = vpack.c.b16 %v480, %v479
        %v510 = vpack.c.b16 %v482, %v481
        %v511 = vpack.c.b16 %v484, %v483
        %v512 = vpack.c.b16 %v486, %v485
        %v513 = vpack.c.b16 %v488, %v487
        %v514 = vpack.c.b16 %v490, %v489
        %v515 = vpack.c.b16 %v492, %v491
        %v516 = vpack.c.b16 %v494, %v493
        %v517 = vpack.c.b16 %v496, %v495
        %v518 = vpack.c.b16 %v498, %v497
        %v519 = vpack.c.b16 %v500, %v499
        %v520 = vpack.c.b16 %v502, %v501
        %v521 = vpack.c.b16 %v504, %v503
        %v522 = vpack.c.b16 %v506, %v505
        %v555 = vunpack.c.l.b16 %v427
        %v556 = vunpack.c.l.b16 %v428
        %v557 = vunpack.c.l.b16 %v429
        %v558 = vunpack.c.l.b16 %v430
        %v559 = vunpack.c.l.b16 %v431
        %v560 = vunpack.c.l.b16 %v432
        %v561 = vunpack.c.l.b16 %v433
        %v562 = vunpack.c.l.b16 %v434
        %v563 = vunpack.c.l.b16 %v435
        %v564 = vunpack.c.l.b16 %v436
        %v565 = vunpack.c.l.b16 %v437
        %v566 = vunpack.c.l.b16 %v438
        %v567 = vunpack.c.l.b16 %v439
        %v568 = vunpack.c.l.b16 %v440
        %v569 = vunpack.c.l.b16 %v441
        %v570 = vunpack.c.l.b16 %v442
        %v571 = vpack.c.b16 %v556, %v555
        %v572 = vpack.c.b16 %v558, %v557
        %v573 = vpack.c.b16 %v560, %v559
        %v574 = vpack.c.b16 %v562, %v561
        %v575 = vpack.c.b16 %v564, %v563
        %v576 = vpack.c.b16 %v566, %v565
        %v577 = vpack.c.b16 %v568, %v567
        %v578 = vpack.c.b16 %v570, %v569
        %587 = vmatpush.bf16.msra.mxu0 %v578
        %588 = vmatpush.bf16.msra.mxu0 %v577
        %589 = vmatpush.bf16.msra.mxu0 %v576
        %590 = vmatpush.bf16.msra.mxu0 %v575
        %591 = vmatpush.bf16.msra.mxu0 %v574
        %592 = vmatpush.bf16.msra.mxu0 %v573
        %593 = vmatpush.bf16.msra.mxu0 %v572
        %594 = vmatpush.bf16.msra.mxu0 %v571
        %595 = vmatmul.bf16.gmra.mxu0 %v507
        %v596 = vpop.f32.mrf.mxu0
        %v597 = vadd.f32 0.0, %v596
        %v598 = vpop.f32.mrf.mxu0
        %v599 = vadd.f32 0.0, %v598
        %600 = vmatmul.bf16.gmra.mxu0 %v508
        %v601 = vpop.f32.mrf.mxu0
        %v602 = vadd.f32 0.0, %v601
        %v603 = vpop.f32.mrf.mxu0
        %v604 = vadd.f32 0.0, %v603
        %605 = vmatmul.bf16.gmra.mxu0 %v509
        %v606 = vpop.f32.mrf.mxu0
        %v607 = vadd.f32 0.0, %v606
        %v608 = vpop.f32.mrf.mxu0
        %v609 = vadd.f32 0.0, %v608
        %610 = vmatmul.bf16.gmra.mxu0 %v510
        %v611 = vpop.f32.mrf.mxu0
        %v612 = vadd.f32 0.0, %v611
        %v613 = vpop.f32.mrf.mxu0
        %v614 = vadd.f32 0.0, %v613
        %615 = vmatmul.bf16.gmra.mxu0 %v511
        %v616 = vpop.f32.mrf.mxu0
        %v617 = vadd.f32 0.0, %v616
        %v618 = vpop.f32.mrf.mxu0
        %v619 = vadd.f32 0.0, %v618
        %620 = vmatmul.bf16.gmra.mxu0 %v512
        %v621 = vpop.f32.mrf.mxu0
        %v622 = vadd.f32 0.0, %v621
        %v623 = vpop.f32.mrf.mxu0
        %v624 = vadd.f32 0.0, %v623
        %625 = vmatmul.bf16.gmra.mxu0 %v513
        %v626 = vpop.f32.mrf.mxu0
        %v627 = vadd.f32 0.0, %v626
        %v628 = vpop.f32.mrf.mxu0
        %v629 = vadd.f32 0.0, %v628
        %630 = vmatmul.bf16.gmra.mxu0 %v514
        %v631 = vpop.f32.mrf.mxu0
        %v632 = vadd.f32 0.0, %v631
        %v633 = vpop.f32.mrf.mxu0
        %v634 = vadd.f32 0.0, %v633
        %635 = vmatmul.bf16.gmra.mxu0 %v515
        %v636 = vpop.f32.mrf.mxu0
        %v637 = vadd.f32 0.0, %v636
        %v638 = vpop.f32.mrf.mxu0
        %v639 = vadd.f32 0.0, %v638
        %640 = vmatmul.bf16.gmra.mxu0 %v516
        %v641 = vpop.f32.mrf.mxu0
        %v642 = vadd.f32 0.0, %v641
        %v643 = vpop.f32.mrf.mxu0
        %v644 = vadd.f32 0.0, %v643
        %645 = vmatmul.bf16.gmra.mxu0 %v517
        %v646 = vpop.f32.mrf.mxu0
        %v647 = vadd.f32 0.0, %v646
        %v648 = vpop.f32.mrf.mxu0
        %v649 = vadd.f32 0.0, %v648
        %650 = vmatmul.bf16.gmra.mxu0 %v518
        %v651 = vpop.f32.mrf.mxu0
        %v652 = vadd.f32 0.0, %v651
        %v653 = vpop.f32.mrf.mxu0
        %v654 = vadd.f32 0.0, %v653
        %655 = vmatmul.bf16.gmra.mxu0 %v519
        %v656 = vpop.f32.mrf.mxu0
        %v657 = vadd.f32 0.0, %v656
        %v658 = vpop.f32.mrf.mxu0
        %v659 = vadd.f32 0.0, %v658
        %660 = vmatmul.bf16.gmra.mxu0 %v520
        %v661 = vpop.f32.mrf.mxu0
        %v662 = vadd.f32 0.0, %v661
        %v663 = vpop.f32.mrf.mxu0
        %v664 = vadd.f32 0.0, %v663
        %665 = vmatmul.bf16.gmra.mxu0 %v521
        %v666 = vpop.f32.mrf.mxu0
        %v667 = vadd.f32 0.0, %v666
        %v668 = vpop.f32.mrf.mxu0
        %v669 = vadd.f32 0.0, %v668
        %670 = vmatmul.bf16.gmra.mxu0 %v522
        %v671 = vpop.f32.mrf.mxu0
        %v672 = vadd.f32 0.0, %v671
        %v673 = vpop.f32.mrf.mxu0
        %v674 = vadd.f32 0.0, %v673
        %675 = vdwg.mxu0
        %v676 = vpack.c.bf16 %v599, %v597
        %v677 = vpack.c.bf16 %v604, %v602
        %v678 = vpack.c.bf16 %v609, %v607
        %v679 = vpack.c.bf16 %v614, %v612
        %v680 = vpack.c.bf16 %v619, %v617
        %v681 = vpack.c.bf16 %v624, %v622
        %v682 = vpack.c.bf16 %v629, %v627
        %v683 = vpack.c.bf16 %v634, %v632
        %v684 = vpack.c.bf16 %v639, %v637
        %v685 = vpack.c.bf16 %v644, %v642
        %v686 = vpack.c.bf16 %v649, %v647
        %v687 = vpack.c.bf16 %v654, %v652
        %v688 = vpack.c.bf16 %v659, %v657
        %v689 = vpack.c.bf16 %v664, %v662
        %v690 = vpack.c.bf16 %v669, %v667
        %v691 = vpack.c.bf16 %v674, %v672
        %v692 = vld [vmem:[#allocation8] sm:$0x1]
        %v694 = vperm.slane %v692, 0
        %v728 = vunpack.c.l.b16 %v363
        %v729 = vunpack.c.h.b16 %v363
        %v730 = vunpack.c.l.b16 %v364
        %v731 = vunpack.c.h.b16 %v364
        %v732 = vunpack.c.l.b16 %v365
        %v733 = vunpack.c.h.b16 %v365
        %v734 = vunpack.c.l.b16 %v366
        %v735 = vunpack.c.h.b16 %v366
        %v736 = vunpack.c.l.b16 %v367
        %v737 = vunpack.c.h.b16 %v367
        %v738 = vunpack.c.l.b16 %v368
        %v739 = vunpack.c.h.b16 %v368
        %v740 = vunpack.c.l.b16 %v369
        %v741 = vunpack.c.h.b16 %v369
        %v742 = vunpack.c.l.b16 %v370
        %v743 = vunpack.c.h.b16 %v370
        %v744 = vunpack.c.l.b16 %v371
        %v745 = vunpack.c.h.b16 %v371
        %v746 = vunpack.c.l.b16 %v372
        %v747 = vunpack.c.h.b16 %v372
        %v748 = vunpack.c.l.b16 %v373
        %v749 = vunpack.c.h.b16 %v373
        %v750 = vunpack.c.l.b16 %v374
        %v751 = vunpack.c.h.b16 %v374
        %v752 = vunpack.c.l.b16 %v375
        %v753 = vunpack.c.h.b16 %v375
        %v754 = vunpack.c.l.b16 %v376
        %v755 = vunpack.c.h.b16 %v376
        %v756 = vunpack.c.l.b16 %v377
        %v757 = vunpack.c.h.b16 %v377
        %v758 = vunpack.c.l.b16 %v378
        %v759 = vunpack.c.h.b16 %v378
        %v760 = vunpack.c.l.b16 %v379
        %v761 = vunpack.c.h.b16 %v379
        %v762 = vunpack.c.l.b16 %v380
        %v763 = vunpack.c.h.b16 %v380
        %v764 = vunpack.c.l.b16 %v381
        %v765 = vunpack.c.h.b16 %v381
        %v766 = vunpack.c.l.b16 %v382
        %v767 = vunpack.c.h.b16 %v382
        %v768 = vunpack.c.l.b16 %v383
        %v769 = vunpack.c.h.b16 %v383
        %v770 = vunpack.c.l.b16 %v384
        %v771 = vunpack.c.h.b16 %v384
        %v772 = vunpack.c.l.b16 %v385
        %v773 = vunpack.c.h.b16 %v385
        %v774 = vunpack.c.l.b16 %v386
        %v775 = vunpack.c.h.b16 %v386
        %v776 = vunpack.c.l.b16 %v387
        %v777 = vunpack.c.h.b16 %v387
        %v778 = vunpack.c.l.b16 %v388
        %v779 = vunpack.c.h.b16 %v388
        %v780 = vunpack.c.l.b16 %v389
        %v781 = vunpack.c.h.b16 %v389
        %v782 = vunpack.c.l.b16 %v390
        %v783 = vunpack.c.h.b16 %v390
        %v784 = vunpack.c.l.b16 %v391
        %v785 = vunpack.c.h.b16 %v391
        %v786 = vunpack.c.l.b16 %v392
        %v787 = vunpack.c.h.b16 %v392
        %v788 = vunpack.c.l.b16 %v393
        %v789 = vunpack.c.h.b16 %v393
        %v790 = vunpack.c.l.b16 %v394
        %v791 = vunpack.c.h.b16 %v394
        %v792 = vpack.c.b16 %v730, %v728
        %v793 = vpack.c.b16 %v731, %v729
        %v794 = vpack.c.b16 %v734, %v732
        %v795 = vpack.c.b16 %v735, %v733
        %v796 = vpack.c.b16 %v738, %v736
        %v797 = vpack.c.b16 %v739, %v737
        %v798 = vpack.c.b16 %v742, %v740
        %v799 = vpack.c.b16 %v743, %v741
        %v800 = vpack.c.b16 %v746, %v744
        %v801 = vpack.c.b16 %v747, %v745
        %v802 = vpack.c.b16 %v750, %v748
        %v803 = vpack.c.b16 %v751, %v749
        %v804 = vpack.c.b16 %v754, %v752
        %v805 = vpack.c.b16 %v755, %v753
        %v806 = vpack.c.b16 %v758, %v756
        %v807 = vpack.c.b16 %v759, %v757
        %v808 = vpack.c.b16 %v762, %v760
        %v809 = vpack.c.b16 %v763, %v761
        %v810 = vpack.c.b16 %v766, %v764
        %v811 = vpack.c.b16 %v767, %v765
        %v812 = vpack.c.b16 %v770, %v768
        %v813 = vpack.c.b16 %v771, %v769
        %v814 = vpack.c.b16 %v774, %v772
        %v815 = vpack.c.b16 %v775, %v773
        %v816 = vpack.c.b16 %v778, %v776
        %v817 = vpack.c.b16 %v779, %v777
        %v818 = vpack.c.b16 %v782, %v780
        %v819 = vpack.c.b16 %v783, %v781
        %v820 = vpack.c.b16 %v786, %v784
        %v821 = vpack.c.b16 %v787, %v785
        %v822 = vpack.c.b16 %v790, %v788
        %v823 = vpack.c.b16 %v791, %v789
        %856 = vmatpush.bf16.msra.mxu0 %v683
        %857 = vmatpush.bf16.msra.mxu0 %v682
        %858 = vmatpush.bf16.msra.mxu0 %v681
        %859 = vmatpush.bf16.msra.mxu0 %v680
        %860 = vmatpush.bf16.msra.mxu0 %v679
        %861 = vmatpush.bf16.msra.mxu0 %v678
        %862 = vmatpush.bf16.msra.mxu0 %v677
        %863 = vmatpush.bf16.msra.mxu0 %v676
        %864 = vmatmul.bf16.gmra.mxu0 %v792
        %v865 = vpop.f32.mrf.mxu0
        %v866 = vadd.f32 %v694, %v865
        %v867 = vpop.f32.mrf.mxu0
        %v868 = vadd.f32 %v694, %v867
        %869 = vmatmul.bf16.gmra.mxu0 %v794
        %v870 = vpop.f32.mrf.mxu0
        %v871 = vadd.f32 %v694, %v870
        %v872 = vpop.f32.mrf.mxu0
        %v873 = vadd.f32 %v694, %v872
        %874 = vmatmul.bf16.gmra.mxu0 %v796
        %v875 = vpop.f32.mrf.mxu0
        %v876 = vadd.f32 %v694, %v875
        %v877 = vpop.f32.mrf.mxu0
        %v878 = vadd.f32 %v694, %v877
        %879 = vmatmul.bf16.gmra.mxu0 %v798
        %v880 = vpop.f32.mrf.mxu0
        %v881 = vadd.f32 %v694, %v880
        %v882 = vpop.f32.mrf.mxu0
        %v883 = vadd.f32 %v694, %v882
        %884 = vmatmul.bf16.gmra.mxu0 %v800
        %v885 = vpop.f32.mrf.mxu0
        %v886 = vadd.f32 %v694, %v885
        %v887 = vpop.f32.mrf.mxu0
        %v888 = vadd.f32 %v694, %v887
        %889 = vmatmul.bf16.gmra.mxu0 %v802
        %v890 = vpop.f32.mrf.mxu0
        %v891 = vadd.f32 %v694, %v890
        %v892 = vpop.f32.mrf.mxu0
        %v893 = vadd.f32 %v694, %v892
        %894 = vmatmul.bf16.gmra.mxu0 %v804
        %v895 = vpop.f32.mrf.mxu0
        %v896 = vadd.f32 %v694, %v895
        %v897 = vpop.f32.mrf.mxu0
        %v898 = vadd.f32 %v694, %v897
        %899 = vmatmul.bf16.gmra.mxu0 %v806
        %v900 = vpop.f32.mrf.mxu0
        %v901 = vadd.f32 %v694, %v900
        %v902 = vpop.f32.mrf.mxu0
        %v903 = vadd.f32 %v694, %v902
        %904 = vmatmul.bf16.gmra.mxu0 %v808
        %v905 = vpop.f32.mrf.mxu0
        %v906 = vadd.f32 %v694, %v905
        %v907 = vpop.f32.mrf.mxu0
        %v908 = vadd.f32 %v694, %v907
        %909 = vmatmul.bf16.gmra.mxu0 %v810
        %v910 = vpop.f32.mrf.mxu0
        %v911 = vadd.f32 %v694, %v910
        %v912 = vpop.f32.mrf.mxu0
        %v913 = vadd.f32 %v694, %v912
        %914 = vmatmul.bf16.gmra.mxu0 %v812
        %v915 = vpop.f32.mrf.mxu0
        %v916 = vadd.f32 %v694, %v915
        %v917 = vpop.f32.mrf.mxu0
        %v918 = vadd.f32 %v694, %v917
        %919 = vmatmul.bf16.gmra.mxu0 %v814
        %v920 = vpop.f32.mrf.mxu0
        %v921 = vadd.f32 %v694, %v920
        %v922 = vpop.f32.mrf.mxu0
        %v923 = vadd.f32 %v694, %v922
        %924 = vmatmul.bf16.gmra.mxu0 %v816
        %v925 = vpop.f32.mrf.mxu0
        %v926 = vadd.f32 %v694, %v925
        %v927 = vpop.f32.mrf.mxu0
        %v928 = vadd.f32 %v694, %v927
        %929 = vmatmul.bf16.gmra.mxu0 %v818
        %v930 = vpop.f32.mrf.mxu0
        %v931 = vadd.f32 %v694, %v930
        %v932 = vpop.f32.mrf.mxu0
        %v933 = vadd.f32 %v694, %v932
        %934 = vmatmul.bf16.gmra.mxu0 %v820
        %v935 = vpop.f32.mrf.mxu0
        %v936 = vadd.f32 %v694, %v935
        %v937 = vpop.f32.mrf.mxu0
        %v938 = vadd.f32 %v694, %v937
        %939 = vmatmul.bf16.gmra.mxu0 %v822
        %v940 = vpop.f32.mrf.mxu0
        %v941 = vadd.f32 %v694, %v940
        %v942 = vpop.f32.mrf.mxu0
        %v943 = vadd.f32 %v694, %v942
        %944 = vdwg.mxu0
        %945 = vmatpush.bf16.msra.mxu0 %v691
        %946 = vmatpush.bf16.msra.mxu0 %v690
        %947 = vmatpush.bf16.msra.mxu0 %v689
        %948 = vmatpush.bf16.msra.mxu0 %v688
        %949 = vmatpush.bf16.msra.mxu0 %v687
        %950 = vmatpush.bf16.msra.mxu0 %v686
        %951 = vmatpush.bf16.msra.mxu0 %v685
        %952 = vmatpush.bf16.msra.mxu0 %v684
        %953 = vmatmul.bf16.gmra.mxu0 %v793
        %v954 = vpop.f32.mrf.mxu0
        %v955 = vadd.f32 %v866, %v954
        %v956 = vpop.f32.mrf.mxu0
        %v957 = vadd.f32 %v868, %v956
        %958 = vmatmul.bf16.gmra.mxu0 %v795
        %v959 = vpop.f32.mrf.mxu0
        %v960 = vadd.f32 %v871, %v959
        %v961 = vpop.f32.mrf.mxu0
        %v962 = vadd.f32 %v873, %v961
        %963 = vmatmul.bf16.gmra.mxu0 %v797
        %v964 = vpop.f32.mrf.mxu0
        %v965 = vadd.f32 %v876, %v964
        %v966 = vpop.f32.mrf.mxu0
        %v967 = vadd.f32 %v878, %v966
        %968 = vmatmul.bf16.gmra.mxu0 %v799
        %v969 = vpop.f32.mrf.mxu0
        %v970 = vadd.f32 %v881, %v969
        %v971 = vpop.f32.mrf.mxu0
        %v972 = vadd.f32 %v883, %v971
        %973 = vmatmul.bf16.gmra.mxu0 %v801
        %v974 = vpop.f32.mrf.mxu0
        %v975 = vadd.f32 %v886, %v974
        %v976 = vpop.f32.mrf.mxu0
        %v977 = vadd.f32 %v888, %v976
        %978 = vmatmul.bf16.gmra.mxu0 %v803
        %v979 = vpop.f32.mrf.mxu0
        %v980 = vadd.f32 %v891, %v979
        %v981 = vpop.f32.mrf.mxu0
        %v982 = vadd.f32 %v893, %v981
        %983 = vmatmul.bf16.gmra.mxu0 %v805
        %v984 = vpop.f32.mrf.mxu0
        %v985 = vadd.f32 %v896, %v984
        %v986 = vpop.f32.mrf.mxu0
        %v987 = vadd.f32 %v898, %v986
        %988 = vmatmul.bf16.gmra.mxu0 %v807
        %v989 = vpop.f32.mrf.mxu0
        %v990 = vadd.f32 %v901, %v989
        %v991 = vpop.f32.mrf.mxu0
        %v992 = vadd.f32 %v903, %v991
        %993 = vmatmul.bf16.gmra.mxu0 %v809
        %v994 = vpop.f32.mrf.mxu0
        %v995 = vadd.f32 %v906, %v994
        %v996 = vpop.f32.mrf.mxu0
        %v997 = vadd.f32 %v908, %v996
        %998 = vmatmul.bf16.gmra.mxu0 %v811
        %v999 = vpop.f32.mrf.mxu0
        %v1000 = vadd.f32 %v911, %v999
        %v1001 = vpop.f32.mrf.mxu0
        %v1002 = vadd.f32 %v913, %v1001
        %1003 = vmatmul.bf16.gmra.mxu0 %v813
        %v1004 = vpop.f32.mrf.mxu0
        %v1005 = vadd.f32 %v916, %v1004
        %v1006 = vpop.f32.mrf.mxu0
        %v1007 = vadd.f32 %v918, %v1006
        %1008 = vmatmul.bf16.gmra.mxu0 %v815
        %v1009 = vpop.f32.mrf.mxu0
        %v1010 = vadd.f32 %v921, %v1009
        %v1011 = vpop.f32.mrf.mxu0
        %v1012 = vadd.f32 %v923, %v1011
        %1013 = vmatmul.bf16.gmra.mxu0 %v817
        %v1014 = vpop.f32.mrf.mxu0
        %v1015 = vadd.f32 %v926, %v1014
        %v1016 = vpop.f32.mrf.mxu0
        %v1017 = vadd.f32 %v928, %v1016
        %1018 = vmatmul.bf16.gmra.mxu0 %v819
        %v1019 = vpop.f32.mrf.mxu0
        %v1020 = vadd.f32 %v931, %v1019
        %v1021 = vpop.f32.mrf.mxu0
        %v1022 = vadd.f32 %v933, %v1021
        %1023 = vmatmul.bf16.gmra.mxu0 %v821
        %v1024 = vpop.f32.mrf.mxu0
        %v1025 = vadd.f32 %v936, %v1024
        %v1026 = vpop.f32.mrf.mxu0
        %v1027 = vadd.f32 %v938, %v1026
        %1028 = vmatmul.bf16.gmra.mxu0 %v823
        %v1029 = vpop.f32.mrf.mxu0
        %v1030 = vadd.f32 %v941, %v1029
        %v1031 = vpop.f32.mrf.mxu0
        %v1032 = vadd.f32 %v943, %v1031
        %1033 = vdwg.mxu0
        %v1034 = vmax.f32 %v955, 0.0
        %v1035 = vmax.f32 %v957, 0.0
        %v1036 = vmax.f32 %v960, 0.0
        %v1037 = vmax.f32 %v962, 0.0
        %v1038 = vmax.f32 %v965, 0.0
        %v1039 = vmax.f32 %v967, 0.0
        %v1040 = vmax.f32 %v970, 0.0
        %v1041 = vmax.f32 %v972, 0.0
        %v1042 = vmax.f32 %v975, 0.0
        %v1043 = vmax.f32 %v977, 0.0
        %v1044 = vmax.f32 %v980, 0.0
        %v1045 = vmax.f32 %v982, 0.0
        %v1046 = vmax.f32 %v985, 0.0
        %v1047 = vmax.f32 %v987, 0.0
        %v1048 = vmax.f32 %v990, 0.0
        %v1049 = vmax.f32 %v992, 0.0
        %v1050 = vmax.f32 %v995, 0.0
        %v1051 = vmax.f32 %v997, 0.0
        %v1052 = vmax.f32 %v1000, 0.0
        %v1053 = vmax.f32 %v1002, 0.0
        %v1054 = vmax.f32 %v1005, 0.0
        %v1055 = vmax.f32 %v1007, 0.0
        %v1056 = vmax.f32 %v1010, 0.0
        %v1057 = vmax.f32 %v1012, 0.0
        %v1058 = vmax.f32 %v1015, 0.0
        %v1059 = vmax.f32 %v1017, 0.0
        %v1060 = vmax.f32 %v1020, 0.0
        %v1061 = vmax.f32 %v1022, 0.0
        %v1062 = vmax.f32 %v1025, 0.0
        %v1063 = vmax.f32 %v1027, 0.0
        %v1064 = vmax.f32 %v1030, 0.0
        %v1065 = vmax.f32 %v1032, 0.0
        %v1066 = vpack.c.bf16 %v1035, %v1034
        %v1067 = vpack.c.bf16 %v1037, %v1036
        %v1068 = vpack.c.bf16 %v1039, %v1038
        %v1069 = vpack.c.bf16 %v1041, %v1040
        %v1070 = vpack.c.bf16 %v1043, %v1042
        %v1071 = vpack.c.bf16 %v1045, %v1044
        %v1072 = vpack.c.bf16 %v1047, %v1046
        %v1073 = vpack.c.bf16 %v1049, %v1048
        %v1074 = vpack.c.bf16 %v1051, %v1050
        %v1075 = vpack.c.bf16 %v1053, %v1052
        %v1076 = vpack.c.bf16 %v1055, %v1054
        %v1077 = vpack.c.bf16 %v1057, %v1056
        %v1078 = vpack.c.bf16 %v1059, %v1058
        %v1079 = vpack.c.bf16 %v1061, %v1060
        %v1080 = vpack.c.bf16 %v1063, %v1062
        %v1081 = vpack.c.bf16 %v1065, %v1064
        %s1082 = scalar_lea.vmem [#allocation7], 64
        %v1083 = vld [vmem:[%s1082] sm:$0xf]
        %v1084 = vld [vmem:[%s1082 + $0x4] sm:$0xf]
        %v1085 = vld [vmem:[%s1082 + $0x8] sm:$0xf]
        %v1086 = vld [vmem:[%s1082 + $0xc] sm:$0xf]
        %v1087 = vld [vmem:[%s1082 + $0x10] sm:$0xf]
        %v1088 = vld [vmem:[%s1082 + $0x14] sm:$0xf]
        %v1089 = vld [vmem:[%s1082 + $0x18] sm:$0xf]
        %v1090 = vld [vmem:[%s1082 + $0x1c] sm:$0xf]
        %v1091 = vld [vmem:[%s1082 + $0x20] sm:$0xf]
        %v1092 = vld [vmem:[%s1082 + $0x24] sm:$0xf]
        %v1093 = vld [vmem:[%s1082 + $0x28] sm:$0xf]
        %v1094 = vld [vmem:[%s1082 + $0x2c] sm:$0xf]
        %v1095 = vld [vmem:[%s1082 + $0x30] sm:$0xf]
        %v1096 = vld [vmem:[%s1082 + $0x34] sm:$0xf]
        %v1097 = vld [vmem:[%s1082 + $0x38] sm:$0xf]
        %v1098 = vld [vmem:[%s1082 + $0x3c] sm:$0xf]
        %v1115 = vunpack.c.l.b16 %v1083
        %v1116 = vunpack.c.l.b16 %v1084
        %v1117 = vunpack.c.l.b16 %v1085
        %v1118 = vunpack.c.l.b16 %v1086
        %v1119 = vunpack.c.l.b16 %v1087
        %v1120 = vunpack.c.l.b16 %v1088
        %v1121 = vunpack.c.l.b16 %v1089
        %v1122 = vunpack.c.l.b16 %v1090
        %v1123 = vunpack.c.l.b16 %v1091
        %v1124 = vunpack.c.l.b16 %v1092
        %v1125 = vunpack.c.l.b16 %v1093
        %v1126 = vunpack.c.l.b16 %v1094
        %v1127 = vunpack.c.l.b16 %v1095
        %v1128 = vunpack.c.l.b16 %v1096
        %v1129 = vunpack.c.l.b16 %v1097
        %v1130 = vunpack.c.l.b16 %v1098
        %v1131 = vpack.c.b16 %v1116, %v1115
        %v1132 = vpack.c.b16 %v1118, %v1117
        %v1133 = vpack.c.b16 %v1120, %v1119
        %v1134 = vpack.c.b16 %v1122, %v1121
        %v1135 = vpack.c.b16 %v1124, %v1123
        %v1136 = vpack.c.b16 %v1126, %v1125
        %v1137 = vpack.c.b16 %v1128, %v1127
        %v1138 = vpack.c.b16 %v1130, %v1129
        %1147 = vmatpush.bf16.msra.mxu0 %v1138
        %1148 = vmatpush.bf16.msra.mxu0 %v1137
        %1149 = vmatpush.bf16.msra.mxu0 %v1136
        %1150 = vmatpush.bf16.msra.mxu0 %v1135
        %1151 = vmatpush.bf16.msra.mxu0 %v1134
        %1152 = vmatpush.bf16.msra.mxu0 %v1133
        %1153 = vmatpush.bf16.msra.mxu0 %v1132
        %1154 = vmatpush.bf16.msra.mxu0 %v1131
        %1155 = vmatmul.bf16.gmra.mxu0 %v1066
        %v1156 = vpop.f32.mrf.mxu0
        %v1157 = vadd.f32 0.0, %v1156
        %v1158 = vpop.f32.mrf.mxu0
        %v1159 = vadd.f32 0.0, %v1158
        %1160 = vmatmul.bf16.gmra.mxu0 %v1067
        %v1161 = vpop.f32.mrf.mxu0
        %v1162 = vadd.f32 0.0, %v1161
        %v1163 = vpop.f32.mrf.mxu0
        %v1164 = vadd.f32 0.0, %v1163
        %1165 = vmatmul.bf16.gmra.mxu0 %v1068
        %v1166 = vpop.f32.mrf.mxu0
        %v1167 = vadd.f32 0.0, %v1166
        %v1168 = vpop.f32.mrf.mxu0
        %v1169 = vadd.f32 0.0, %v1168
        %1170 = vmatmul.bf16.gmra.mxu0 %v1069
        %v1171 = vpop.f32.mrf.mxu0
        %v1172 = vadd.f32 0.0, %v1171
        %v1173 = vpop.f32.mrf.mxu0
        %v1174 = vadd.f32 0.0, %v1173
        %1175 = vmatmul.bf16.gmra.mxu0 %v1070
        %v1176 = vpop.f32.mrf.mxu0
        %v1177 = vadd.f32 0.0, %v1176
        %v1178 = vpop.f32.mrf.mxu0
        %v1179 = vadd.f32 0.0, %v1178
        %1180 = vmatmul.bf16.gmra.mxu0 %v1071
        %v1181 = vpop.f32.mrf.mxu0
        %v1182 = vadd.f32 0.0, %v1181
        %v1183 = vpop.f32.mrf.mxu0
        %v1184 = vadd.f32 0.0, %v1183
        %1185 = vmatmul.bf16.gmra.mxu0 %v1072
        %v1186 = vpop.f32.mrf.mxu0
        %v1187 = vadd.f32 0.0, %v1186
        %v1188 = vpop.f32.mrf.mxu0
        %v1189 = vadd.f32 0.0, %v1188
        %1190 = vmatmul.bf16.gmra.mxu0 %v1073
        %v1191 = vpop.f32.mrf.mxu0
        %v1192 = vadd.f32 0.0, %v1191
        %v1193 = vpop.f32.mrf.mxu0
        %v1194 = vadd.f32 0.0, %v1193
        %1195 = vmatmul.bf16.gmra.mxu0 %v1074
        %v1196 = vpop.f32.mrf.mxu0
        %v1197 = vadd.f32 0.0, %v1196
        %v1198 = vpop.f32.mrf.mxu0
        %v1199 = vadd.f32 0.0, %v1198
        %1200 = vmatmul.bf16.gmra.mxu0 %v1075
        %v1201 = vpop.f32.mrf.mxu0
        %v1202 = vadd.f32 0.0, %v1201
        %v1203 = vpop.f32.mrf.mxu0
        %v1204 = vadd.f32 0.0, %v1203
        %1205 = vmatmul.bf16.gmra.mxu0 %v1076
        %v1206 = vpop.f32.mrf.mxu0
        %v1207 = vadd.f32 0.0, %v1206
        %v1208 = vpop.f32.mrf.mxu0
        %v1209 = vadd.f32 0.0, %v1208
        %1210 = vmatmul.bf16.gmra.mxu0 %v1077
        %v1211 = vpop.f32.mrf.mxu0
        %v1212 = vadd.f32 0.0, %v1211
        %v1213 = vpop.f32.mrf.mxu0
        %v1214 = vadd.f32 0.0, %v1213
        %1215 = vmatmul.bf16.gmra.mxu0 %v1078
        %v1216 = vpop.f32.mrf.mxu0
        %v1217 = vadd.f32 0.0, %v1216
        %v1218 = vpop.f32.mrf.mxu0
        %v1219 = vadd.f32 0.0, %v1218
        %1220 = vmatmul.bf16.gmra.mxu0 %v1079
        %v1221 = vpop.f32.mrf.mxu0
        %v1222 = vadd.f32 0.0, %v1221
        %v1223 = vpop.f32.mrf.mxu0
        %v1224 = vadd.f32 0.0, %v1223
        %1225 = vmatmul.bf16.gmra.mxu0 %v1080
        %v1226 = vpop.f32.mrf.mxu0
        %v1227 = vadd.f32 0.0, %v1226
        %v1228 = vpop.f32.mrf.mxu0
        %v1229 = vadd.f32 0.0, %v1228
        %1230 = vmatmul.bf16.gmra.mxu0 %v1081
        %v1231 = vpop.f32.mrf.mxu0
        %v1232 = vadd.f32 0.0, %v1231
        %v1233 = vpop.f32.mrf.mxu0
        %v1234 = vadd.f32 0.0, %v1233
        %1235 = vdwg.mxu0
        %v1236 = vpack.c.bf16 %v1159, %v1157
        %v1237 = vpack.c.bf16 %v1164, %v1162
        %v1238 = vpack.c.bf16 %v1169, %v1167
        %v1239 = vpack.c.bf16 %v1174, %v1172
        %v1240 = vpack.c.bf16 %v1179, %v1177
        %v1241 = vpack.c.bf16 %v1184, %v1182
        %v1242 = vpack.c.bf16 %v1189, %v1187
        %v1243 = vpack.c.bf16 %v1194, %v1192
        %v1244 = vpack.c.bf16 %v1199, %v1197
        %v1245 = vpack.c.bf16 %v1204, %v1202
        %v1246 = vpack.c.bf16 %v1209, %v1207
        %v1247 = vpack.c.bf16 %v1214, %v1212
        %v1248 = vpack.c.bf16 %v1219, %v1217
        %v1249 = vpack.c.bf16 %v1224, %v1222
        %v1250 = vpack.c.bf16 %v1229, %v1227
        %v1251 = vpack.c.bf16 %v1234, %v1232
        %s1252 = scalar_lea.vmem [#allocation8], 1
        %v1253 = vld [vmem:[%s1252] sm:$0x1]
        %v1255 = vperm.slane %v1253, 0
        %1257 = vmatpush.bf16.msra.mxu0 %v1243
        %1258 = vmatpush.bf16.msra.mxu0 %v1242
        %1259 = vmatpush.bf16.msra.mxu0 %v1241
        %1260 = vmatpush.bf16.msra.mxu0 %v1240
        %1261 = vmatpush.bf16.msra.mxu0 %v1239
        %1262 = vmatpush.bf16.msra.mxu0 %v1238
        %1263 = vmatpush.bf16.msra.mxu0 %v1237
        %1264 = vmatpush.bf16.msra.mxu0 %v1236
        %1265 = vmatmul.bf16.gmra.mxu0 %v792
        %v1266 = vpop.f32.mrf.mxu0
        %v1267 = vadd.f32 %v1255, %v1266
        %v1268 = vpop.f32.mrf.mxu0
        %v1269 = vadd.f32 %v1255, %v1268
        %1270 = vmatmul.bf16.gmra.mxu0 %v794
        %v1271 = vpop.f32.mrf.mxu0
        %v1272 = vadd.f32 %v1255, %v1271
        %v1273 = vpop.f32.mrf.mxu0
        %v1274 = vadd.f32 %v1255, %v1273
        %1275 = vmatmul.bf16.gmra.mxu0 %v796
        %v1276 = vpop.f32.mrf.mxu0
        %v1277 = vadd.f32 %v1255, %v1276
        %v1278 = vpop.f32.mrf.mxu0
        %v1279 = vadd.f32 %v1255, %v1278
        %1280 = vmatmul.bf16.gmra.mxu0 %v798
        %v1281 = vpop.f32.mrf.mxu0
        %v1282 = vadd.f32 %v1255, %v1281
        %v1283 = vpop.f32.mrf.mxu0
        %v1284 = vadd.f32 %v1255, %v1283
        %1285 = vmatmul.bf16.gmra.mxu0 %v800
        %v1286 = vpop.f32.mrf.mxu0
        %v1287 = vadd.f32 %v1255, %v1286
        %v1288 = vpop.f32.mrf.mxu0
        %v1289 = vadd.f32 %v1255, %v1288
        %1290 = vmatmul.bf16.gmra.mxu0 %v802
        %v1291 = vpop.f32.mrf.mxu0
        %v1292 = vadd.f32 %v1255, %v1291
        %v1293 = vpop.f32.mrf.mxu0
        %v1294 = vadd.f32 %v1255, %v1293
        %1295 = vmatmul.bf16.gmra.mxu0 %v804
        %v1296 = vpop.f32.mrf.mxu0
        %v1297 = vadd.f32 %v1255, %v1296
        %v1298 = vpop.f32.mrf.mxu0
        %v1299 = vadd.f32 %v1255, %v1298
        %1300 = vmatmul.bf16.gmra.mxu0 %v806
        %v1301 = vpop.f32.mrf.mxu0
        %v1302 = vadd.f32 %v1255, %v1301
        %v1303 = vpop.f32.mrf.mxu0
        %v1304 = vadd.f32 %v1255, %v1303
        %1305 = vmatmul.bf16.gmra.mxu0 %v808
        %v1306 = vpop.f32.mrf.mxu0
        %v1307 = vadd.f32 %v1255, %v1306
        %v1308 = vpop.f32.mrf.mxu0
        %v1309 = vadd.f32 %v1255, %v1308
        %1310 = vmatmul.bf16.gmra.mxu0 %v810
        %v1311 = vpop.f32.mrf.mxu0
        %v1312 = vadd.f32 %v1255, %v1311
        %v1313 = vpop.f32.mrf.mxu0
        %v1314 = vadd.f32 %v1255, %v1313
        %1315 = vmatmul.bf16.gmra.mxu0 %v812
        %v1316 = vpop.f32.mrf.mxu0
        %v1317 = vadd.f32 %v1255, %v1316
        %v1318 = vpop.f32.mrf.mxu0
        %v1319 = vadd.f32 %v1255, %v1318
        %1320 = vmatmul.bf16.gmra.mxu0 %v814
        %v1321 = vpop.f32.mrf.mxu0
        %v1322 = vadd.f32 %v1255, %v1321
        %v1323 = vpop.f32.mrf.mxu0
        %v1324 = vadd.f32 %v1255, %v1323
        %1325 = vmatmul.bf16.gmra.mxu0 %v816
        %v1326 = vpop.f32.mrf.mxu0
        %v1327 = vadd.f32 %v1255, %v1326
        %v1328 = vpop.f32.mrf.mxu0
        %v1329 = vadd.f32 %v1255, %v1328
        %1330 = vmatmul.bf16.gmra.mxu0 %v818
        %v1331 = vpop.f32.mrf.mxu0
        %v1332 = vadd.f32 %v1255, %v1331
        %v1333 = vpop.f32.mrf.mxu0
        %v1334 = vadd.f32 %v1255, %v1333
        %1335 = vmatmul.bf16.gmra.mxu0 %v820
        %v1336 = vpop.f32.mrf.mxu0
        %v1337 = vadd.f32 %v1255, %v1336
        %v1338 = vpop.f32.mrf.mxu0
        %v1339 = vadd.f32 %v1255, %v1338
        %1340 = vmatmul.bf16.gmra.mxu0 %v822
        %v1341 = vpop.f32.mrf.mxu0
        %v1342 = vadd.f32 %v1255, %v1341
        %v1343 = vpop.f32.mrf.mxu0
        %v1344 = vadd.f32 %v1255, %v1343
        %1345 = vdwg.mxu0
        %1346 = vmatpush.bf16.msra.mxu0 %v1251
        %1347 = vmatpush.bf16.msra.mxu0 %v1250
        %1348 = vmatpush.bf16.msra.mxu0 %v1249
        %1349 = vmatpush.bf16.msra.mxu0 %v1248
        %1350 = vmatpush.bf16.msra.mxu0 %v1247
        %1351 = vmatpush.bf16.msra.mxu0 %v1246
        %1352 = vmatpush.bf16.msra.mxu0 %v1245
        %1353 = vmatpush.bf16.msra.mxu0 %v1244
        %1354 = vmatmul.bf16.gmra.mxu0 %v793
        %v1355 = vpop.f32.mrf.mxu0
        %v1356 = vadd.f32 %v1267, %v1355
        %v1357 = vpop.f32.mrf.mxu0
        %v1358 = vadd.f32 %v1269, %v1357
        %1359 = vmatmul.bf16.gmra.mxu0 %v795
        %v1360 = vpop.f32.mrf.mxu0
        %v1361 = vadd.f32 %v1272, %v1360
        %v1362 = vpop.f32.mrf.mxu0
        %v1363 = vadd.f32 %v1274, %v1362
        %1364 = vmatmul.bf16.gmra.mxu0 %v797
        %v1365 = vpop.f32.mrf.mxu0
        %v1366 = vadd.f32 %v1277, %v1365
        %v1367 = vpop.f32.mrf.mxu0
        %v1368 = vadd.f32 %v1279, %v1367
        %1369 = vmatmul.bf16.gmra.mxu0 %v799
        %v1370 = vpop.f32.mrf.mxu0
        %v1371 = vadd.f32 %v1282, %v1370
        %v1372 = vpop.f32.mrf.mxu0
        %v1373 = vadd.f32 %v1284, %v1372
        %1374 = vmatmul.bf16.gmra.mxu0 %v801
        %v1375 = vpop.f32.mrf.mxu0
        %v1376 = vadd.f32 %v1287, %v1375
        %v1377 = vpop.f32.mrf.mxu0
        %v1378 = vadd.f32 %v1289, %v1377
        %1379 = vmatmul.bf16.gmra.mxu0 %v803
        %v1380 = vpop.f32.mrf.mxu0
        %v1381 = vadd.f32 %v1292, %v1380
        %v1382 = vpop.f32.mrf.mxu0
        %v1383 = vadd.f32 %v1294, %v1382
        %1384 = vmatmul.bf16.gmra.mxu0 %v805
        %v1385 = vpop.f32.mrf.mxu0
        %v1386 = vadd.f32 %v1297, %v1385
        %v1387 = vpop.f32.mrf.mxu0
        %v1388 = vadd.f32 %v1299, %v1387
        %1389 = vmatmul.bf16.gmra.mxu0 %v807
        %v1390 = vpop.f32.mrf.mxu0
        %v1391 = vadd.f32 %v1302, %v1390
        %v1392 = vpop.f32.mrf.mxu0
        %v1393 = vadd.f32 %v1304, %v1392
        %1394 = vmatmul.bf16.gmra.mxu0 %v809
        %v1395 = vpop.f32.mrf.mxu0
        %v1396 = vadd.f32 %v1307, %v1395
        %v1397 = vpop.f32.mrf.mxu0
        %v1398 = vadd.f32 %v1309, %v1397
        %1399 = vmatmul.bf16.gmra.mxu0 %v811
        %v1400 = vpop.f32.mrf.mxu0
        %v1401 = vadd.f32 %v1312, %v1400
        %v1402 = vpop.f32.mrf.mxu0
        %v1403 = vadd.f32 %v1314, %v1402
        %1404 = vmatmul.bf16.gmra.mxu0 %v813
        %v1405 = vpop.f32.mrf.mxu0
        %v1406 = vadd.f32 %v1317, %v1405
        %v1407 = vpop.f32.mrf.mxu0
        %v1408 = vadd.f32 %v1319, %v1407
        %1409 = vmatmul.bf16.gmra.mxu0 %v815
        %v1410 = vpop.f32.mrf.mxu0
        %v1411 = vadd.f32 %v1322, %v1410
        %v1412 = vpop.f32.mrf.mxu0
        %v1413 = vadd.f32 %v1324, %v1412
        %1414 = vmatmul.bf16.gmra.mxu0 %v817
        %v1415 = vpop.f32.mrf.mxu0
        %v1416 = vadd.f32 %v1327, %v1415
        %v1417 = vpop.f32.mrf.mxu0
        %v1418 = vadd.f32 %v1329, %v1417
        %1419 = vmatmul.bf16.gmra.mxu0 %v819
        %v1420 = vpop.f32.mrf.mxu0
        %v1421 = vadd.f32 %v1332, %v1420
        %v1422 = vpop.f32.mrf.mxu0
        %v1423 = vadd.f32 %v1334, %v1422
        %1424 = vmatmul.bf16.gmra.mxu0 %v821
        %v1425 = vpop.f32.mrf.mxu0
        %v1426 = vadd.f32 %v1337, %v1425
        %v1427 = vpop.f32.mrf.mxu0
        %v1428 = vadd.f32 %v1339, %v1427
        %1429 = vmatmul.bf16.gmra.mxu0 %v823
        %v1430 = vpop.f32.mrf.mxu0
        %v1431 = vadd.f32 %v1342, %v1430
        %v1432 = vpop.f32.mrf.mxu0
        %v1433 = vadd.f32 %v1344, %v1432
        %1434 = vdwg.mxu0
        %v1435 = vmax.f32 %v1356, 0.0
        %v1436 = vmax.f32 %v1358, 0.0
        %v1437 = vmax.f32 %v1361, 0.0
        %v1438 = vmax.f32 %v1363, 0.0
        %v1439 = vmax.f32 %v1366, 0.0
        %v1440 = vmax.f32 %v1368, 0.0
        %v1441 = vmax.f32 %v1371, 0.0
        %v1442 = vmax.f32 %v1373, 0.0
        %v1443 = vmax.f32 %v1376, 0.0
        %v1444 = vmax.f32 %v1378, 0.0
        %v1445 = vmax.f32 %v1381, 0.0
        %v1446 = vmax.f32 %v1383, 0.0
        %v1447 = vmax.f32 %v1386, 0.0
        %v1448 = vmax.f32 %v1388, 0.0
        %v1449 = vmax.f32 %v1391, 0.0
        %v1450 = vmax.f32 %v1393, 0.0
        %v1451 = vmax.f32 %v1396, 0.0
        %v1452 = vmax.f32 %v1398, 0.0
        %v1453 = vmax.f32 %v1401, 0.0
        %v1454 = vmax.f32 %v1403, 0.0
        %v1455 = vmax.f32 %v1406, 0.0
        %v1456 = vmax.f32 %v1408, 0.0
        %v1457 = vmax.f32 %v1411, 0.0
        %v1458 = vmax.f32 %v1413, 0.0
        %v1459 = vmax.f32 %v1416, 0.0
        %v1460 = vmax.f32 %v1418, 0.0
        %v1461 = vmax.f32 %v1421, 0.0
        %v1462 = vmax.f32 %v1423, 0.0
        %v1463 = vmax.f32 %v1426, 0.0
        %v1464 = vmax.f32 %v1428, 0.0
        %v1465 = vmax.f32 %v1431, 0.0
        %v1466 = vmax.f32 %v1433, 0.0
        %v1467 = vpack.c.bf16 %v1436, %v1435
        %v1468 = vpack.c.bf16 %v1438, %v1437
        %v1469 = vpack.c.bf16 %v1440, %v1439
        %v1470 = vpack.c.bf16 %v1442, %v1441
        %v1471 = vpack.c.bf16 %v1444, %v1443
        %v1472 = vpack.c.bf16 %v1446, %v1445
        %v1473 = vpack.c.bf16 %v1448, %v1447
        %v1474 = vpack.c.bf16 %v1450, %v1449
        %v1475 = vpack.c.bf16 %v1452, %v1451
        %v1476 = vpack.c.bf16 %v1454, %v1453
        %v1477 = vpack.c.bf16 %v1456, %v1455
        %v1478 = vpack.c.bf16 %v1458, %v1457
        %v1479 = vpack.c.bf16 %v1460, %v1459
        %v1480 = vpack.c.bf16 %v1462, %v1461
        %v1481 = vpack.c.bf16 %v1464, %v1463
        %v1482 = vpack.c.bf16 %v1466, %v1465
        %s1483 = scalar_lea.vmem [#allocation7], 128
        %v1484 = vld [vmem:[%s1483] sm:$0xf]
        %v1485 = vld [vmem:[%s1483 + $0x4] sm:$0xf]
        %v1486 = vld [vmem:[%s1483 + $0x8] sm:$0xf]
        %v1487 = vld [vmem:[%s1483 + $0xc] sm:$0xf]
        %v1488 = vld [vmem:[%s1483 + $0x10] sm:$0xf]
        %v1489 = vld [vmem:[%s1483 + $0x14] sm:$0xf]
        %v1490 = vld [vmem:[%s1483 + $0x18] sm:$0xf]
        %v1491 = vld [vmem:[%s1483 + $0x1c] sm:$0xf]
        %v1492 = vld [vmem:[%s1483 + $0x20] sm:$0xf]
        %v1493 = vld [vmem:[%s1483 + $0x24] sm:$0xf]
        %v1494 = vld [vmem:[%s1483 + $0x28] sm:$0xf]
        %v1495 = vld [vmem:[%s1483 + $0x2c] sm:$0xf]
        %v1496 = vld [vmem:[%s1483 + $0x30] sm:$0xf]
        %v1497 = vld [vmem:[%s1483 + $0x34] sm:$0xf]
        %v1498 = vld [vmem:[%s1483 + $0x38] sm:$0xf]
        %v1499 = vld [vmem:[%s1483 + $0x3c] sm:$0xf]
        %v1516 = vunpack.c.l.b16 %v1484
        %v1517 = vunpack.c.l.b16 %v1485
        %v1518 = vunpack.c.l.b16 %v1486
        %v1519 = vunpack.c.l.b16 %v1487
        %v1520 = vunpack.c.l.b16 %v1488
        %v1521 = vunpack.c.l.b16 %v1489
        %v1522 = vunpack.c.l.b16 %v1490
        %v1523 = vunpack.c.l.b16 %v1491
        %v1524 = vunpack.c.l.b16 %v1492
        %v1525 = vunpack.c.l.b16 %v1493
        %v1526 = vunpack.c.l.b16 %v1494
        %v1527 = vunpack.c.l.b16 %v1495
        %v1528 = vunpack.c.l.b16 %v1496
        %v1529 = vunpack.c.l.b16 %v1497
        %v1530 = vunpack.c.l.b16 %v1498
        %v1531 = vunpack.c.l.b16 %v1499
        %v1532 = vpack.c.b16 %v1517, %v1516
        %v1533 = vpack.c.b16 %v1519, %v1518
        %v1534 = vpack.c.b16 %v1521, %v1520
        %v1535 = vpack.c.b16 %v1523, %v1522
        %v1536 = vpack.c.b16 %v1525, %v1524
        %v1537 = vpack.c.b16 %v1527, %v1526
        %v1538 = vpack.c.b16 %v1529, %v1528
        %v1539 = vpack.c.b16 %v1531, %v1530
        %1548 = vmatpush.bf16.msra.mxu0 %v1539
        %1549 = vmatpush.bf16.msra.mxu0 %v1538
        %1550 = vmatpush.bf16.msra.mxu0 %v1537
        %1551 = vmatpush.bf16.msra.mxu0 %v1536
        %1552 = vmatpush.bf16.msra.mxu0 %v1535
        %1553 = vmatpush.bf16.msra.mxu0 %v1534
        %1554 = vmatpush.bf16.msra.mxu0 %v1533
        %1555 = vmatpush.bf16.msra.mxu0 %v1532
        %1556 = vmatmul.bf16.gmra.mxu0 %v1467
        %v1557 = vpop.f32.mrf.mxu0
        %v1558 = vadd.f32 0.0, %v1557
        %v1559 = vpop.f32.mrf.mxu0
        %v1560 = vadd.f32 0.0, %v1559
        %1561 = vmatmul.bf16.gmra.mxu0 %v1468
        %v1562 = vpop.f32.mrf.mxu0
        %v1563 = vadd.f32 0.0, %v1562
        %v1564 = vpop.f32.mrf.mxu0
        %v1565 = vadd.f32 0.0, %v1564
        %1566 = vmatmul.bf16.gmra.mxu0 %v1469
        %v1567 = vpop.f32.mrf.mxu0
        %v1568 = vadd.f32 0.0, %v1567
        %v1569 = vpop.f32.mrf.mxu0
        %v1570 = vadd.f32 0.0, %v1569
        %1571 = vmatmul.bf16.gmra.mxu0 %v1470
        %v1572 = vpop.f32.mrf.mxu0
        %v1573 = vadd.f32 0.0, %v1572
        %v1574 = vpop.f32.mrf.mxu0
        %v1575 = vadd.f32 0.0, %v1574
        %1576 = vmatmul.bf16.gmra.mxu0 %v1471
        %v1577 = vpop.f32.mrf.mxu0
        %v1578 = vadd.f32 0.0, %v1577
        %v1579 = vpop.f32.mrf.mxu0
        %v1580 = vadd.f32 0.0, %v1579
        %1581 = vmatmul.bf16.gmra.mxu0 %v1472
        %v1582 = vpop.f32.mrf.mxu0
        %v1583 = vadd.f32 0.0, %v1582
        %v1584 = vpop.f32.mrf.mxu0
        %v1585 = vadd.f32 0.0, %v1584
        %1586 = vmatmul.bf16.gmra.mxu0 %v1473
        %v1587 = vpop.f32.mrf.mxu0
        %v1588 = vadd.f32 0.0, %v1587
        %v1589 = vpop.f32.mrf.mxu0
        %v1590 = vadd.f32 0.0, %v1589
        %1591 = vmatmul.bf16.gmra.mxu0 %v1474
        %v1592 = vpop.f32.mrf.mxu0
        %v1593 = vadd.f32 0.0, %v1592
        %v1594 = vpop.f32.mrf.mxu0
        %v1595 = vadd.f32 0.0, %v1594
        %1596 = vmatmul.bf16.gmra.mxu0 %v1475
        %v1597 = vpop.f32.mrf.mxu0
        %v1598 = vadd.f32 0.0, %v1597
        %v1599 = vpop.f32.mrf.mxu0
        %v1600 = vadd.f32 0.0, %v1599
        %1601 = vmatmul.bf16.gmra.mxu0 %v1476
        %v1602 = vpop.f32.mrf.mxu0
        %v1603 = vadd.f32 0.0, %v1602
        %v1604 = vpop.f32.mrf.mxu0
        %v1605 = vadd.f32 0.0, %v1604
        %1606 = vmatmul.bf16.gmra.mxu0 %v1477
        %v1607 = vpop.f32.mrf.mxu0
        %v1608 = vadd.f32 0.0, %v1607
        %v1609 = vpop.f32.mrf.mxu0
        %v1610 = vadd.f32 0.0, %v1609
        %1611 = vmatmul.bf16.gmra.mxu0 %v1478
        %v1612 = vpop.f32.mrf.mxu0
        %v1613 = vadd.f32 0.0, %v1612
        %v1614 = vpop.f32.mrf.mxu0
        %v1615 = vadd.f32 0.0, %v1614
        %1616 = vmatmul.bf16.gmra.mxu0 %v1479
        %v1617 = vpop.f32.mrf.mxu0
        %v1618 = vadd.f32 0.0, %v1617
        %v1619 = vpop.f32.mrf.mxu0
        %v1620 = vadd.f32 0.0, %v1619
        %1621 = vmatmul.bf16.gmra.mxu0 %v1480
        %v1622 = vpop.f32.mrf.mxu0
        %v1623 = vadd.f32 0.0, %v1622
        %v1624 = vpop.f32.mrf.mxu0
        %v1625 = vadd.f32 0.0, %v1624
        %1626 = vmatmul.bf16.gmra.mxu0 %v1481
        %v1627 = vpop.f32.mrf.mxu0
        %v1628 = vadd.f32 0.0, %v1627
        %v1629 = vpop.f32.mrf.mxu0
        %v1630 = vadd.f32 0.0, %v1629
        %1631 = vmatmul.bf16.gmra.mxu0 %v1482
        %v1632 = vpop.f32.mrf.mxu0
        %v1633 = vadd.f32 0.0, %v1632
        %v1634 = vpop.f32.mrf.mxu0
        %v1635 = vadd.f32 0.0, %v1634
        %1636 = vdwg.mxu0
        %v1637 = vpack.c.bf16 %v1560, %v1558
        %v1638 = vpack.c.bf16 %v1565, %v1563
        %v1639 = vpack.c.bf16 %v1570, %v1568
        %v1640 = vpack.c.bf16 %v1575, %v1573
        %v1641 = vpack.c.bf16 %v1580, %v1578
        %v1642 = vpack.c.bf16 %v1585, %v1583
        %v1643 = vpack.c.bf16 %v1590, %v1588
        %v1644 = vpack.c.bf16 %v1595, %v1593
        %v1645 = vpack.c.bf16 %v1600, %v1598
        %v1646 = vpack.c.bf16 %v1605, %v1603
        %v1647 = vpack.c.bf16 %v1610, %v1608
        %v1648 = vpack.c.bf16 %v1615, %v1613
        %v1649 = vpack.c.bf16 %v1620, %v1618
        %v1650 = vpack.c.bf16 %v1625, %v1623
        %v1651 = vpack.c.bf16 %v1630, %v1628
        %v1652 = vpack.c.bf16 %v1635, %v1633
        %s1653 = scalar_lea.vmem [#allocation8], 2
        %v1654 = vld [vmem:[%s1653] sm:$0x1]
        %v1656 = vperm.slane %v1654, 0
        %1658 = vmatpush.bf16.msra.mxu0 %v1644
        %1659 = vmatpush.bf16.msra.mxu0 %v1643
        %1660 = vmatpush.bf16.msra.mxu0 %v1642
        %1661 = vmatpush.bf16.msra.mxu0 %v1641
        %1662 = vmatpush.bf16.msra.mxu0 %v1640
        %1663 = vmatpush.bf16.msra.mxu0 %v1639
        %1664 = vmatpush.bf16.msra.mxu0 %v1638
        %1665 = vmatpush.bf16.msra.mxu0 %v1637
        %1666 = vmatmul.bf16.gmra.mxu0 %v792
        %v1667 = vpop.f32.mrf.mxu0
        %v1668 = vadd.f32 %v1656, %v1667
        %v1669 = vpop.f32.mrf.mxu0
        %v1670 = vadd.f32 %v1656, %v1669
        %1671 = vmatmul.bf16.gmra.mxu0 %v794
        %v1672 = vpop.f32.mrf.mxu0
        %v1673 = vadd.f32 %v1656, %v1672
        %v1674 = vpop.f32.mrf.mxu0
        %v1675 = vadd.f32 %v1656, %v1674
        %1676 = vmatmul.bf16.gmra.mxu0 %v796
        %v1677 = vpop.f32.mrf.mxu0
        %v1678 = vadd.f32 %v1656, %v1677
        %v1679 = vpop.f32.mrf.mxu0
        %v1680 = vadd.f32 %v1656, %v1679
        %1681 = vmatmul.bf16.gmra.mxu0 %v798
        %v1682 = vpop.f32.mrf.mxu0
        %v1683 = vadd.f32 %v1656, %v1682
        %v1684 = vpop.f32.mrf.mxu0
        %v1685 = vadd.f32 %v1656, %v1684
        %1686 = vmatmul.bf16.gmra.mxu0 %v800
        %v1687 = vpop.f32.mrf.mxu0
        %v1688 = vadd.f32 %v1656, %v1687
        %v1689 = vpop.f32.mrf.mxu0
        %v1690 = vadd.f32 %v1656, %v1689
        %1691 = vmatmul.bf16.gmra.mxu0 %v802
        %v1692 = vpop.f32.mrf.mxu0
        %v1693 = vadd.f32 %v1656, %v1692
        %v1694 = vpop.f32.mrf.mxu0
        %v1695 = vadd.f32 %v1656, %v1694
        %1696 = vmatmul.bf16.gmra.mxu0 %v804
        %v1697 = vpop.f32.mrf.mxu0
        %v1698 = vadd.f32 %v1656, %v1697
        %v1699 = vpop.f32.mrf.mxu0
        %v1700 = vadd.f32 %v1656, %v1699
        %1701 = vmatmul.bf16.gmra.mxu0 %v806
        %v1702 = vpop.f32.mrf.mxu0
        %v1703 = vadd.f32 %v1656, %v1702
        %v1704 = vpop.f32.mrf.mxu0
        %v1705 = vadd.f32 %v1656, %v1704
        %1706 = vmatmul.bf16.gmra.mxu0 %v808
        %v1707 = vpop.f32.mrf.mxu0
        %v1708 = vadd.f32 %v1656, %v1707
        %v1709 = vpop.f32.mrf.mxu0
        %v1710 = vadd.f32 %v1656, %v1709
        %1711 = vmatmul.bf16.gmra.mxu0 %v810
        %v1712 = vpop.f32.mrf.mxu0
        %v1713 = vadd.f32 %v1656, %v1712
        %v1714 = vpop.f32.mrf.mxu0
        %v1715 = vadd.f32 %v1656, %v1714
        %1716 = vmatmul.bf16.gmra.mxu0 %v812
        %v1717 = vpop.f32.mrf.mxu0
        %v1718 = vadd.f32 %v1656, %v1717
        %v1719 = vpop.f32.mrf.mxu0
        %v1720 = vadd.f32 %v1656, %v1719
        %1721 = vmatmul.bf16.gmra.mxu0 %v814
        %v1722 = vpop.f32.mrf.mxu0
        %v1723 = vadd.f32 %v1656, %v1722
        %v1724 = vpop.f32.mrf.mxu0
        %v1725 = vadd.f32 %v1656, %v1724
        %1726 = vmatmul.bf16.gmra.mxu0 %v816
        %v1727 = vpop.f32.mrf.mxu0
        %v1728 = vadd.f32 %v1656, %v1727
        %v1729 = vpop.f32.mrf.mxu0
        %v1730 = vadd.f32 %v1656, %v1729
        %1731 = vmatmul.bf16.gmra.mxu0 %v818
        %v1732 = vpop.f32.mrf.mxu0
        %v1733 = vadd.f32 %v1656, %v1732
        %v1734 = vpop.f32.mrf.mxu0
        %v1735 = vadd.f32 %v1656, %v1734
        %1736 = vmatmul.bf16.gmra.mxu0 %v820
        %v1737 = vpop.f32.mrf.mxu0
        %v1738 = vadd.f32 %v1656, %v1737
        %v1739 = vpop.f32.mrf.mxu0
        %v1740 = vadd.f32 %v1656, %v1739
        %1741 = vmatmul.bf16.gmra.mxu0 %v822
        %v1742 = vpop.f32.mrf.mxu0
        %v1743 = vadd.f32 %v1656, %v1742
        %v1744 = vpop.f32.mrf.mxu0
        %v1745 = vadd.f32 %v1656, %v1744
        %1746 = vdwg.mxu0
        %1747 = vmatpush.bf16.msra.mxu0 %v1652
        %1748 = vmatpush.bf16.msra.mxu0 %v1651
        %1749 = vmatpush.bf16.msra.mxu0 %v1650
        %1750 = vmatpush.bf16.msra.mxu0 %v1649
        %1751 = vmatpush.bf16.msra.mxu0 %v1648
        %1752 = vmatpush.bf16.msra.mxu0 %v1647
        %1753 = vmatpush.bf16.msra.mxu0 %v1646
        %1754 = vmatpush.bf16.msra.mxu0 %v1645
        %1755 = vmatmul.bf16.gmra.mxu0 %v793
        %v1756 = vpop.f32.mrf.mxu0
        %v1757 = vadd.f32 %v1668, %v1756
        %v1758 = vpop.f32.mrf.mxu0
        %v1759 = vadd.f32 %v1670, %v1758
        %1760 = vmatmul.bf16.gmra.mxu0 %v795
        %v1761 = vpop.f32.mrf.mxu0
        %v1762 = vadd.f32 %v1673, %v1761
        %v1763 = vpop.f32.mrf.mxu0
        %v1764 = vadd.f32 %v1675, %v1763
        %1765 = vmatmul.bf16.gmra.mxu0 %v797
        %v1766 = vpop.f32.mrf.mxu0
        %v1767 = vadd.f32 %v1678, %v1766
        %v1768 = vpop.f32.mrf.mxu0
        %v1769 = vadd.f32 %v1680, %v1768
        %1770 = vmatmul.bf16.gmra.mxu0 %v799
        %v1771 = vpop.f32.mrf.mxu0
        %v1772 = vadd.f32 %v1683, %v1771
        %v1773 = vpop.f32.mrf.mxu0
        %v1774 = vadd.f32 %v1685, %v1773
        %1775 = vmatmul.bf16.gmra.mxu0 %v801
        %v1776 = vpop.f32.mrf.mxu0
        %v1777 = vadd.f32 %v1688, %v1776
        %v1778 = vpop.f32.mrf.mxu0
        %v1779 = vadd.f32 %v1690, %v1778
        %1780 = vmatmul.bf16.gmra.mxu0 %v803
        %v1781 = vpop.f32.mrf.mxu0
        %v1782 = vadd.f32 %v1693, %v1781
        %v1783 = vpop.f32.mrf.mxu0
        %v1784 = vadd.f32 %v1695, %v1783
        %1785 = vmatmul.bf16.gmra.mxu0 %v805
        %v1786 = vpop.f32.mrf.mxu0
        %v1787 = vadd.f32 %v1698, %v1786
        %v1788 = vpop.f32.mrf.mxu0
        %v1789 = vadd.f32 %v1700, %v1788
        %1790 = vmatmul.bf16.gmra.mxu0 %v807
        %v1791 = vpop.f32.mrf.mxu0
        %v1792 = vadd.f32 %v1703, %v1791
        %v1793 = vpop.f32.mrf.mxu0
        %v1794 = vadd.f32 %v1705, %v1793
        %1795 = vmatmul.bf16.gmra.mxu0 %v809
        %v1796 = vpop.f32.mrf.mxu0
        %v1797 = vadd.f32 %v1708, %v1796
        %v1798 = vpop.f32.mrf.mxu0
        %v1799 = vadd.f32 %v1710, %v1798
        %1800 = vmatmul.bf16.gmra.mxu0 %v811
        %v1801 = vpop.f32.mrf.mxu0
        %v1802 = vadd.f32 %v1713, %v1801
        %v1803 = vpop.f32.mrf.mxu0
        %v1804 = vadd.f32 %v1715, %v1803
        %1805 = vmatmul.bf16.gmra.mxu0 %v813
        %v1806 = vpop.f32.mrf.mxu0
        %v1807 = vadd.f32 %v1718, %v1806
        %v1808 = vpop.f32.mrf.mxu0
        %v1809 = vadd.f32 %v1720, %v1808
        %1810 = vmatmul.bf16.gmra.mxu0 %v815
        %v1811 = vpop.f32.mrf.mxu0
        %v1812 = vadd.f32 %v1723, %v1811
        %v1813 = vpop.f32.mrf.mxu0
        %v1814 = vadd.f32 %v1725, %v1813
        %1815 = vmatmul.bf16.gmra.mxu0 %v817
        %v1816 = vpop.f32.mrf.mxu0
        %v1817 = vadd.f32 %v1728, %v1816
        %v1818 = vpop.f32.mrf.mxu0
        %v1819 = vadd.f32 %v1730, %v1818
        %1820 = vmatmul.bf16.gmra.mxu0 %v819
        %v1821 = vpop.f32.mrf.mxu0
        %v1822 = vadd.f32 %v1733, %v1821
        %v1823 = vpop.f32.mrf.mxu0
        %v1824 = vadd.f32 %v1735, %v1823
        %1825 = vmatmul.bf16.gmra.mxu0 %v821
        %v1826 = vpop.f32.mrf.mxu0
        %v1827 = vadd.f32 %v1738, %v1826
        %v1828 = vpop.f32.mrf.mxu0
        %v1829 = vadd.f32 %v1740, %v1828
        %1830 = vmatmul.bf16.gmra.mxu0 %v823
        %v1831 = vpop.f32.mrf.mxu0
        %v1832 = vadd.f32 %v1743, %v1831
        %v1833 = vpop.f32.mrf.mxu0
        %v1834 = vadd.f32 %v1745, %v1833
        %1835 = vdwg.mxu0
        %v1836 = vmax.f32 %v1757, 0.0
        %v1837 = vmax.f32 %v1759, 0.0
        %v1838 = vmax.f32 %v1762, 0.0
        %v1839 = vmax.f32 %v1764, 0.0
        %v1840 = vmax.f32 %v1767, 0.0
        %v1841 = vmax.f32 %v1769, 0.0
        %v1842 = vmax.f32 %v1772, 0.0
        %v1843 = vmax.f32 %v1774, 0.0
        %v1844 = vmax.f32 %v1777, 0.0
        %v1845 = vmax.f32 %v1779, 0.0
        %v1846 = vmax.f32 %v1782, 0.0
        %v1847 = vmax.f32 %v1784, 0.0
        %v1848 = vmax.f32 %v1787, 0.0
        %v1849 = vmax.f32 %v1789, 0.0
        %v1850 = vmax.f32 %v1792, 0.0
        %v1851 = vmax.f32 %v1794, 0.0
        %v1852 = vmax.f32 %v1797, 0.0
        %v1853 = vmax.f32 %v1799, 0.0
        %v1854 = vmax.f32 %v1802, 0.0
        %v1855 = vmax.f32 %v1804, 0.0
        %v1856 = vmax.f32 %v1807, 0.0
        %v1857 = vmax.f32 %v1809, 0.0
        %v1858 = vmax.f32 %v1812, 0.0
        %v1859 = vmax.f32 %v1814, 0.0
        %v1860 = vmax.f32 %v1817, 0.0
        %v1861 = vmax.f32 %v1819, 0.0
        %v1862 = vmax.f32 %v1822, 0.0
        %v1863 = vmax.f32 %v1824, 0.0
        %v1864 = vmax.f32 %v1827, 0.0
        %v1865 = vmax.f32 %v1829, 0.0
        %v1866 = vmax.f32 %v1832, 0.0
        %v1867 = vmax.f32 %v1834, 0.0
        %v1868 = vpack.c.bf16 %v1837, %v1836
        %v1869 = vpack.c.bf16 %v1839, %v1838
        %v1870 = vpack.c.bf16 %v1841, %v1840
        %v1871 = vpack.c.bf16 %v1843, %v1842
        %v1872 = vpack.c.bf16 %v1845, %v1844
        %v1873 = vpack.c.bf16 %v1847, %v1846
        %v1874 = vpack.c.bf16 %v1849, %v1848
        %v1875 = vpack.c.bf16 %v1851, %v1850
        %v1876 = vpack.c.bf16 %v1853, %v1852
        %v1877 = vpack.c.bf16 %v1855, %v1854
        %v1878 = vpack.c.bf16 %v1857, %v1856
        %v1879 = vpack.c.bf16 %v1859, %v1858
        %v1880 = vpack.c.bf16 %v1861, %v1860
        %v1881 = vpack.c.bf16 %v1863, %v1862
        %v1882 = vpack.c.bf16 %v1865, %v1864
        %v1883 = vpack.c.bf16 %v1867, %v1866
        %s1884 = scalar_lea.vmem [#allocation7], 192
        %v1885 = vld [vmem:[%s1884] sm:$0xf]
        %v1886 = vld [vmem:[%s1884 + $0x4] sm:$0xf]
        %v1887 = vld [vmem:[%s1884 + $0x8] sm:$0xf]
        %v1888 = vld [vmem:[%s1884 + $0xc] sm:$0xf]
        %v1889 = vld [vmem:[%s1884 + $0x10] sm:$0xf]
        %v1890 = vld [vmem:[%s1884 + $0x14] sm:$0xf]
        %v1891 = vld [vmem:[%s1884 + $0x18] sm:$0xf]
        %v1892 = vld [vmem:[%s1884 + $0x1c] sm:$0xf]
        %v1893 = vld [vmem:[%s1884 + $0x20] sm:$0xf]
        %v1894 = vld [vmem:[%s1884 + $0x24] sm:$0xf]
        %v1895 = vld [vmem:[%s1884 + $0x28] sm:$0xf]
        %v1896 = vld [vmem:[%s1884 + $0x2c] sm:$0xf]
        %v1897 = vld [vmem:[%s1884 + $0x30] sm:$0xf]
        %v1898 = vld [vmem:[%s1884 + $0x34] sm:$0xf]
        %v1899 = vld [vmem:[%s1884 + $0x38] sm:$0xf]
        %v1900 = vld [vmem:[%s1884 + $0x3c] sm:$0xf]
        %v1917 = vunpack.c.l.b16 %v1885
        %v1918 = vunpack.c.l.b16 %v1886
        %v1919 = vunpack.c.l.b16 %v1887
        %v1920 = vunpack.c.l.b16 %v1888
        %v1921 = vunpack.c.l.b16 %v1889
        %v1922 = vunpack.c.l.b16 %v1890
        %v1923 = vunpack.c.l.b16 %v1891
        %v1924 = vunpack.c.l.b16 %v1892
        %v1925 = vunpack.c.l.b16 %v1893
        %v1926 = vunpack.c.l.b16 %v1894
        %v1927 = vunpack.c.l.b16 %v1895
        %v1928 = vunpack.c.l.b16 %v1896
        %v1929 = vunpack.c.l.b16 %v1897
        %v1930 = vunpack.c.l.b16 %v1898
        %v1931 = vunpack.c.l.b16 %v1899
        %v1932 = vunpack.c.l.b16 %v1900
        %v1933 = vpack.c.b16 %v1918, %v1917
        %v1934 = vpack.c.b16 %v1920, %v1919
        %v1935 = vpack.c.b16 %v1922, %v1921
        %v1936 = vpack.c.b16 %v1924, %v1923
        %v1937 = vpack.c.b16 %v1926, %v1925
        %v1938 = vpack.c.b16 %v1928, %v1927
        %v1939 = vpack.c.b16 %v1930, %v1929
        %v1940 = vpack.c.b16 %v1932, %v1931
        %1949 = vmatpush.bf16.msra.mxu0 %v1940
        %1950 = vmatpush.bf16.msra.mxu0 %v1939
        %1951 = vmatpush.bf16.msra.mxu0 %v1938
        %1952 = vmatpush.bf16.msra.mxu0 %v1937
        %1953 = vmatpush.bf16.msra.mxu0 %v1936
        %1954 = vmatpush.bf16.msra.mxu0 %v1935
        %1955 = vmatpush.bf16.msra.mxu0 %v1934
        %1956 = vmatpush.bf16.msra.mxu0 %v1933
        %1957 = vmatmul.bf16.gmra.mxu0 %v1868
        %v1958 = vpop.f32.mrf.mxu0
        %v1959 = vadd.f32 0.0, %v1958
        %v1960 = vpop.f32.mrf.mxu0
        %v1961 = vadd.f32 0.0, %v1960
        %1962 = vmatmul.bf16.gmra.mxu0 %v1869
        %v1963 = vpop.f32.mrf.mxu0
        %v1964 = vadd.f32 0.0, %v1963
        %v1965 = vpop.f32.mrf.mxu0
        %v1966 = vadd.f32 0.0, %v1965
        %1967 = vmatmul.bf16.gmra.mxu0 %v1870
        %v1968 = vpop.f32.mrf.mxu0
        %v1969 = vadd.f32 0.0, %v1968
        %v1970 = vpop.f32.mrf.mxu0
        %v1971 = vadd.f32 0.0, %v1970
        %1972 = vmatmul.bf16.gmra.mxu0 %v1871
        %v1973 = vpop.f32.mrf.mxu0
        %v1974 = vadd.f32 0.0, %v1973
        %v1975 = vpop.f32.mrf.mxu0
        %v1976 = vadd.f32 0.0, %v1975
        %1977 = vmatmul.bf16.gmra.mxu0 %v1872
        %v1978 = vpop.f32.mrf.mxu0
        %v1979 = vadd.f32 0.0, %v1978
        %v1980 = vpop.f32.mrf.mxu0
        %v1981 = vadd.f32 0.0, %v1980
        %1982 = vmatmul.bf16.gmra.mxu0 %v1873
        %v1983 = vpop.f32.mrf.mxu0
        %v1984 = vadd.f32 0.0, %v1983
        %v1985 = vpop.f32.mrf.mxu0
        %v1986 = vadd.f32 0.0, %v1985
        %1987 = vmatmul.bf16.gmra.mxu0 %v1874
        %v1988 = vpop.f32.mrf.mxu0
        %v1989 = vadd.f32 0.0, %v1988
        %v1990 = vpop.f32.mrf.mxu0
        %v1991 = vadd.f32 0.0, %v1990
        %1992 = vmatmul.bf16.gmra.mxu0 %v1875
        %v1993 = vpop.f32.mrf.mxu0
        %v1994 = vadd.f32 0.0, %v1993
        %v1995 = vpop.f32.mrf.mxu0
        %v1996 = vadd.f32 0.0, %v1995
        %1997 = vmatmul.bf16.gmra.mxu0 %v1876
        %v1998 = vpop.f32.mrf.mxu0
        %v1999 = vadd.f32 0.0, %v1998
        %v2000 = vpop.f32.mrf.mxu0
        %v2001 = vadd.f32 0.0, %v2000
        %2002 = vmatmul.bf16.gmra.mxu0 %v1877
        %v2003 = vpop.f32.mrf.mxu0
        %v2004 = vadd.f32 0.0, %v2003
        %v2005 = vpop.f32.mrf.mxu0
        %v2006 = vadd.f32 0.0, %v2005
        %2007 = vmatmul.bf16.gmra.mxu0 %v1878
        %v2008 = vpop.f32.mrf.mxu0
        %v2009 = vadd.f32 0.0, %v2008
        %v2010 = vpop.f32.mrf.mxu0
        %v2011 = vadd.f32 0.0, %v2010
        %2012 = vmatmul.bf16.gmra.mxu0 %v1879
        %v2013 = vpop.f32.mrf.mxu0
        %v2014 = vadd.f32 0.0, %v2013
        %v2015 = vpop.f32.mrf.mxu0
        %v2016 = vadd.f32 0.0, %v2015
        %2017 = vmatmul.bf16.gmra.mxu0 %v1880
        %v2018 = vpop.f32.mrf.mxu0
        %v2019 = vadd.f32 0.0, %v2018
        %v2020 = vpop.f32.mrf.mxu0
        %v2021 = vadd.f32 0.0, %v2020
        %2022 = vmatmul.bf16.gmra.mxu0 %v1881
        %v2023 = vpop.f32.mrf.mxu0
        %v2024 = vadd.f32 0.0, %v2023
        %v2025 = vpop.f32.mrf.mxu0
        %v2026 = vadd.f32 0.0, %v2025
        %2027 = vmatmul.bf16.gmra.mxu0 %v1882
        %v2028 = vpop.f32.mrf.mxu0
        %v2029 = vadd.f32 0.0, %v2028
        %v2030 = vpop.f32.mrf.mxu0
        %v2031 = vadd.f32 0.0, %v2030
        %2032 = vmatmul.bf16.gmra.mxu0 %v1883
        %v2033 = vpop.f32.mrf.mxu0
        %v2034 = vadd.f32 0.0, %v2033
        %v2035 = vpop.f32.mrf.mxu0
        %v2036 = vadd.f32 0.0, %v2035
        %2037 = vdwg.mxu0
        %v2038 = vpack.c.bf16 %v1961, %v1959
        %v2039 = vpack.c.bf16 %v1966, %v1964
        %v2040 = vpack.c.bf16 %v1971, %v1969
        %v2041 = vpack.c.bf16 %v1976, %v1974
        %v2042 = vpack.c.bf16 %v1981, %v1979
        %v2043 = vpack.c.bf16 %v1986, %v1984
        %v2044 = vpack.c.bf16 %v1991, %v1989
        %v2045 = vpack.c.bf16 %v1996, %v1994
        %v2046 = vpack.c.bf16 %v2001, %v1999
        %v2047 = vpack.c.bf16 %v2006, %v2004
        %v2048 = vpack.c.bf16 %v2011, %v2009
        %v2049 = vpack.c.bf16 %v2016, %v2014
        %v2050 = vpack.c.bf16 %v2021, %v2019
        %v2051 = vpack.c.bf16 %v2026, %v2024
        %v2052 = vpack.c.bf16 %v2031, %v2029
        %v2053 = vpack.c.bf16 %v2036, %v2034
        %s2054 = scalar_lea.vmem [#allocation8], 3
        %v2055 = vld [vmem:[%s2054] sm:$0x1]
        %v2057 = vperm.slane %v2055, 0
        %2059 = vmatpush.bf16.msra.mxu0 %v2045
        %2060 = vmatpush.bf16.msra.mxu0 %v2044
        %2061 = vmatpush.bf16.msra.mxu0 %v2043
        %2062 = vmatpush.bf16.msra.mxu0 %v2042
        %2063 = vmatpush.bf16.msra.mxu0 %v2041
        %2064 = vmatpush.bf16.msra.mxu0 %v2040
        %2065 = vmatpush.bf16.msra.mxu0 %v2039
        %2066 = vmatpush.bf16.msra.mxu0 %v2038
        %2067 = vmatmul.bf16.gmra.mxu0 %v792
        %v2068 = vpop.f32.mrf.mxu0
        %v2069 = vadd.f32 %v2057, %v2068
        %v2070 = vpop.f32.mrf.mxu0
        %v2071 = vadd.f32 %v2057, %v2070
        %2072 = vmatmul.bf16.gmra.mxu0 %v794
        %v2073 = vpop.f32.mrf.mxu0
        %v2074 = vadd.f32 %v2057, %v2073
        %v2075 = vpop.f32.mrf.mxu0
        %v2076 = vadd.f32 %v2057, %v2075
        %2077 = vmatmul.bf16.gmra.mxu0 %v796
        %v2078 = vpop.f32.mrf.mxu0
        %v2079 = vadd.f32 %v2057, %v2078
        %v2080 = vpop.f32.mrf.mxu0
        %v2081 = vadd.f32 %v2057, %v2080
        %2082 = vmatmul.bf16.gmra.mxu0 %v798
        %v2083 = vpop.f32.mrf.mxu0
        %v2084 = vadd.f32 %v2057, %v2083
        %v2085 = vpop.f32.mrf.mxu0
        %v2086 = vadd.f32 %v2057, %v2085
        %2087 = vmatmul.bf16.gmra.mxu0 %v800
        %v2088 = vpop.f32.mrf.mxu0
        %v2089 = vadd.f32 %v2057, %v2088
        %v2090 = vpop.f32.mrf.mxu0
        %v2091 = vadd.f32 %v2057, %v2090
        %2092 = vmatmul.bf16.gmra.mxu0 %v802
        %v2093 = vpop.f32.mrf.mxu0
        %v2094 = vadd.f32 %v2057, %v2093
        %v2095 = vpop.f32.mrf.mxu0
        %v2096 = vadd.f32 %v2057, %v2095
        %2097 = vmatmul.bf16.gmra.mxu0 %v804
        %v2098 = vpop.f32.mrf.mxu0
        %v2099 = vadd.f32 %v2057, %v2098
        %v2100 = vpop.f32.mrf.mxu0
        %v2101 = vadd.f32 %v2057, %v2100
        %2102 = vmatmul.bf16.gmra.mxu0 %v806
        %v2103 = vpop.f32.mrf.mxu0
        %v2104 = vadd.f32 %v2057, %v2103
        %v2105 = vpop.f32.mrf.mxu0
        %v2106 = vadd.f32 %v2057, %v2105
        %2107 = vmatmul.bf16.gmra.mxu0 %v808
        %v2108 = vpop.f32.mrf.mxu0
        %v2109 = vadd.f32 %v2057, %v2108
        %v2110 = vpop.f32.mrf.mxu0
        %v2111 = vadd.f32 %v2057, %v2110
        %2112 = vmatmul.bf16.gmra.mxu0 %v810
        %v2113 = vpop.f32.mrf.mxu0
        %v2114 = vadd.f32 %v2057, %v2113
        %v2115 = vpop.f32.mrf.mxu0
        %v2116 = vadd.f32 %v2057, %v2115
        %2117 = vmatmul.bf16.gmra.mxu0 %v812
        %v2118 = vpop.f32.mrf.mxu0
        %v2119 = vadd.f32 %v2057, %v2118
        %v2120 = vpop.f32.mrf.mxu0
        %v2121 = vadd.f32 %v2057, %v2120
        %2122 = vmatmul.bf16.gmra.mxu0 %v814
        %v2123 = vpop.f32.mrf.mxu0
        %v2124 = vadd.f32 %v2057, %v2123
        %v2125 = vpop.f32.mrf.mxu0
        %v2126 = vadd.f32 %v2057, %v2125
        %2127 = vmatmul.bf16.gmra.mxu0 %v816
        %v2128 = vpop.f32.mrf.mxu0
        %v2129 = vadd.f32 %v2057, %v2128
        %v2130 = vpop.f32.mrf.mxu0
        %v2131 = vadd.f32 %v2057, %v2130
        %2132 = vmatmul.bf16.gmra.mxu0 %v818
        %v2133 = vpop.f32.mrf.mxu0
        %v2134 = vadd.f32 %v2057, %v2133
        %v2135 = vpop.f32.mrf.mxu0
        %v2136 = vadd.f32 %v2057, %v2135
        %2137 = vmatmul.bf16.gmra.mxu0 %v820
        %v2138 = vpop.f32.mrf.mxu0
        %v2139 = vadd.f32 %v2057, %v2138
        %v2140 = vpop.f32.mrf.mxu0
        %v2141 = vadd.f32 %v2057, %v2140
        %2142 = vmatmul.bf16.gmra.mxu0 %v822
        %v2143 = vpop.f32.mrf.mxu0
        %v2144 = vadd.f32 %v2057, %v2143
        %v2145 = vpop.f32.mrf.mxu0
        %v2146 = vadd.f32 %v2057, %v2145
        %2147 = vdwg.mxu0
        %2148 = vmatpush.bf16.msra.mxu0 %v2053
        %2149 = vmatpush.bf16.msra.mxu0 %v2052
        %2150 = vmatpush.bf16.msra.mxu0 %v2051
        %2151 = vmatpush.bf16.msra.mxu0 %v2050
        %2152 = vmatpush.bf16.msra.mxu0 %v2049
        %2153 = vmatpush.bf16.msra.mxu0 %v2048
        %2154 = vmatpush.bf16.msra.mxu0 %v2047
        %2155 = vmatpush.bf16.msra.mxu0 %v2046
        %2156 = vmatmul.bf16.gmra.mxu0 %v793
        %v2157 = vpop.f32.mrf.mxu0
        %v2158 = vadd.f32 %v2069, %v2157
        %v2159 = vpop.f32.mrf.mxu0
        %v2160 = vadd.f32 %v2071, %v2159
        %2161 = vmatmul.bf16.gmra.mxu0 %v795
        %v2162 = vpop.f32.mrf.mxu0
        %v2163 = vadd.f32 %v2074, %v2162
        %v2164 = vpop.f32.mrf.mxu0
        %v2165 = vadd.f32 %v2076, %v2164
        %2166 = vmatmul.bf16.gmra.mxu0 %v797
        %v2167 = vpop.f32.mrf.mxu0
        %v2168 = vadd.f32 %v2079, %v2167
        %v2169 = vpop.f32.mrf.mxu0
        %v2170 = vadd.f32 %v2081, %v2169
        %2171 = vmatmul.bf16.gmra.mxu0 %v799
        %v2172 = vpop.f32.mrf.mxu0
        %v2173 = vadd.f32 %v2084, %v2172
        %v2174 = vpop.f32.mrf.mxu0
        %v2175 = vadd.f32 %v2086, %v2174
        %2176 = vmatmul.bf16.gmra.mxu0 %v801
        %v2177 = vpop.f32.mrf.mxu0
        %v2178 = vadd.f32 %v2089, %v2177
        %v2179 = vpop.f32.mrf.mxu0
        %v2180 = vadd.f32 %v2091, %v2179
        %2181 = vmatmul.bf16.gmra.mxu0 %v803
        %v2182 = vpop.f32.mrf.mxu0
        %v2183 = vadd.f32 %v2094, %v2182
        %v2184 = vpop.f32.mrf.mxu0
        %v2185 = vadd.f32 %v2096, %v2184
        %2186 = vmatmul.bf16.gmra.mxu0 %v805
        %v2187 = vpop.f32.mrf.mxu0
        %v2188 = vadd.f32 %v2099, %v2187
        %v2189 = vpop.f32.mrf.mxu0
        %v2190 = vadd.f32 %v2101, %v2189
        %2191 = vmatmul.bf16.gmra.mxu0 %v807
        %v2192 = vpop.f32.mrf.mxu0
        %v2193 = vadd.f32 %v2104, %v2192
        %v2194 = vpop.f32.mrf.mxu0
        %v2195 = vadd.f32 %v2106, %v2194
        %2196 = vmatmul.bf16.gmra.mxu0 %v809
        %v2197 = vpop.f32.mrf.mxu0
        %v2198 = vadd.f32 %v2109, %v2197
        %v2199 = vpop.f32.mrf.mxu0
        %v2200 = vadd.f32 %v2111, %v2199
        %2201 = vmatmul.bf16.gmra.mxu0 %v811
        %v2202 = vpop.f32.mrf.mxu0
        %v2203 = vadd.f32 %v2114, %v2202
        %v2204 = vpop.f32.mrf.mxu0
        %v2205 = vadd.f32 %v2116, %v2204
        %2206 = vmatmul.bf16.gmra.mxu0 %v813
        %v2207 = vpop.f32.mrf.mxu0
        %v2208 = vadd.f32 %v2119, %v2207
        %v2209 = vpop.f32.mrf.mxu0
        %v2210 = vadd.f32 %v2121, %v2209
        %2211 = vmatmul.bf16.gmra.mxu0 %v815
        %v2212 = vpop.f32.mrf.mxu0
        %v2213 = vadd.f32 %v2124, %v2212
        %v2214 = vpop.f32.mrf.mxu0
        %v2215 = vadd.f32 %v2126, %v2214
        %2216 = vmatmul.bf16.gmra.mxu0 %v817
        %v2217 = vpop.f32.mrf.mxu0
        %v2218 = vadd.f32 %v2129, %v2217
        %v2219 = vpop.f32.mrf.mxu0
        %v2220 = vadd.f32 %v2131, %v2219
        %2221 = vmatmul.bf16.gmra.mxu0 %v819
        %v2222 = vpop.f32.mrf.mxu0
        %v2223 = vadd.f32 %v2134, %v2222
        %v2224 = vpop.f32.mrf.mxu0
        %v2225 = vadd.f32 %v2136, %v2224
        %2226 = vmatmul.bf16.gmra.mxu0 %v821
        %v2227 = vpop.f32.mrf.mxu0
        %v2228 = vadd.f32 %v2139, %v2227
        %v2229 = vpop.f32.mrf.mxu0
        %v2230 = vadd.f32 %v2141, %v2229
        %2231 = vmatmul.bf16.gmra.mxu0 %v823
        %v2232 = vpop.f32.mrf.mxu0
        %v2233 = vadd.f32 %v2144, %v2232
        %v2234 = vpop.f32.mrf.mxu0
        %v2235 = vadd.f32 %v2146, %v2234
        %2236 = vdwg.mxu0
        %v2237 = vmax.f32 %v2158, 0.0
        %v2238 = vmax.f32 %v2160, 0.0
        %v2239 = vmax.f32 %v2163, 0.0
        %v2240 = vmax.f32 %v2165, 0.0
        %v2241 = vmax.f32 %v2168, 0.0
        %v2242 = vmax.f32 %v2170, 0.0
        %v2243 = vmax.f32 %v2173, 0.0
        %v2244 = vmax.f32 %v2175, 0.0
        %v2245 = vmax.f32 %v2178, 0.0
        %v2246 = vmax.f32 %v2180, 0.0
        %v2247 = vmax.f32 %v2183, 0.0
        %v2248 = vmax.f32 %v2185, 0.0
        %v2249 = vmax.f32 %v2188, 0.0
        %v2250 = vmax.f32 %v2190, 0.0
        %v2251 = vmax.f32 %v2193, 0.0
        %v2252 = vmax.f32 %v2195, 0.0
        %v2253 = vmax.f32 %v2198, 0.0
        %v2254 = vmax.f32 %v2200, 0.0
        %v2255 = vmax.f32 %v2203, 0.0
        %v2256 = vmax.f32 %v2205, 0.0
        %v2257 = vmax.f32 %v2208, 0.0
        %v2258 = vmax.f32 %v2210, 0.0
        %v2259 = vmax.f32 %v2213, 0.0
        %v2260 = vmax.f32 %v2215, 0.0
        %v2261 = vmax.f32 %v2218, 0.0
        %v2262 = vmax.f32 %v2220, 0.0
        %v2263 = vmax.f32 %v2223, 0.0
        %v2264 = vmax.f32 %v2225, 0.0
        %v2265 = vmax.f32 %v2228, 0.0
        %v2266 = vmax.f32 %v2230, 0.0
        %v2267 = vmax.f32 %v2233, 0.0
        %v2268 = vmax.f32 %v2235, 0.0
        %v2269 = vpack.c.bf16 %v2237, %v2237
        %v2270 = vpack.c.bf16 %v2238, %v2238
        %v2271 = vpack.c.bf16 %v2239, %v2239
        %v2272 = vpack.c.bf16 %v2240, %v2240
        %v2273 = vpack.c.bf16 %v2241, %v2241
        %v2274 = vpack.c.bf16 %v2242, %v2242
        %v2275 = vpack.c.bf16 %v2243, %v2243
        %v2276 = vpack.c.bf16 %v2244, %v2244
        %v2277 = vpack.c.bf16 %v2245, %v2245
        %v2278 = vpack.c.bf16 %v2246, %v2246
        %v2279 = vpack.c.bf16 %v2247, %v2247
        %v2280 = vpack.c.bf16 %v2248, %v2248
        %v2281 = vpack.c.bf16 %v2249, %v2249
        %v2282 = vpack.c.bf16 %v2250, %v2250
        %v2283 = vpack.c.bf16 %v2251, %v2251
        %v2284 = vpack.c.bf16 %v2252, %v2252
        %v2285 = vpack.c.bf16 %v2253, %v2253
        %v2286 = vpack.c.bf16 %v2254, %v2254
        %v2287 = vpack.c.bf16 %v2255, %v2255
        %v2288 = vpack.c.bf16 %v2256, %v2256
        %v2289 = vpack.c.bf16 %v2257, %v2257
        %v2290 = vpack.c.bf16 %v2258, %v2258
        %v2291 = vpack.c.bf16 %v2259, %v2259
        %v2292 = vpack.c.bf16 %v2260, %v2260
        %v2293 = vpack.c.bf16 %v2261, %v2261
        %v2294 = vpack.c.bf16 %v2262, %v2262
        %v2295 = vpack.c.bf16 %v2263, %v2263
        %v2296 = vpack.c.bf16 %v2264, %v2264
        %v2297 = vpack.c.bf16 %v2265, %v2265
        %v2298 = vpack.c.bf16 %v2266, %v2266
        %v2299 = vpack.c.bf16 %v2267, %v2267
        %v2300 = vpack.c.bf16 %v2268, %v2268
        %v2301 = vunpack.c.l.bf16 %v2269
        %v2302 = vunpack.c.l.bf16 %v2270
        %v2303 = vunpack.c.l.bf16 %v2271
        %v2304 = vunpack.c.l.bf16 %v2272
        %v2305 = vunpack.c.l.bf16 %v2273
        %v2306 = vunpack.c.l.bf16 %v2274
        %v2307 = vunpack.c.l.bf16 %v2275
        %v2308 = vunpack.c.l.bf16 %v2276
        %v2309 = vunpack.c.l.bf16 %v2277
        %v2310 = vunpack.c.l.bf16 %v2278
        %v2311 = vunpack.c.l.bf16 %v2279
        %v2312 = vunpack.c.l.bf16 %v2280
        %v2313 = vunpack.c.l.bf16 %v2281
        %v2314 = vunpack.c.l.bf16 %v2282
        %v2315 = vunpack.c.l.bf16 %v2283
        %v2316 = vunpack.c.l.bf16 %v2284
        %v2317 = vunpack.c.l.bf16 %v2285
        %v2318 = vunpack.c.l.bf16 %v2286
        %v2319 = vunpack.c.l.bf16 %v2287
        %v2320 = vunpack.c.l.bf16 %v2288
        %v2321 = vunpack.c.l.bf16 %v2289
        %v2322 = vunpack.c.l.bf16 %v2290
        %v2323 = vunpack.c.l.bf16 %v2291
        %v2324 = vunpack.c.l.bf16 %v2292
        %v2325 = vunpack.c.l.bf16 %v2293
        %v2326 = vunpack.c.l.bf16 %v2294
        %v2327 = vunpack.c.l.bf16 %v2295
        %v2328 = vunpack.c.l.bf16 %v2296
        %v2329 = vunpack.c.l.bf16 %v2297
        %v2330 = vunpack.c.l.bf16 %v2298
        %v2331 = vunpack.c.l.bf16 %v2299
        %v2332 = vunpack.c.l.bf16 %v2300
        %v2333 = vlaneseq
        %v2334 = vshrl.u32 %v2333, 7
        %v2335 = vadd.s32 %v2334, 8
        %vm2336 = vcmp.lt.s32.totalorder %v2334, 16
        %vm2337 = vcmp.lt.s32.totalorder %v2335, 16
        %v2338 = vsel %vm2336, 0.0625, 0.0
        %v2339 = vsel %vm2337, 0.0625, 0.0
        %v2340 = vmul.f32 %v2301, %v2338
        %v2341 = vmul.f32 %v2302, %v2339
        %v2342 = vmul.f32 %v2303, %v2338
        %v2343 = vmul.f32 %v2304, %v2339
        %v2344 = vmul.f32 %v2305, %v2338
        %v2345 = vmul.f32 %v2306, %v2339
        %v2346 = vmul.f32 %v2307, %v2338
        %v2347 = vmul.f32 %v2308, %v2339
        %v2348 = vmul.f32 %v2309, %v2338
        %v2349 = vmul.f32 %v2310, %v2339
        %v2350 = vmul.f32 %v2311, %v2338
        %v2351 = vmul.f32 %v2312, %v2339
        %v2352 = vmul.f32 %v2313, %v2338
        %v2353 = vmul.f32 %v2314, %v2339
        %v2354 = vmul.f32 %v2315, %v2338
        %v2355 = vmul.f32 %v2316, %v2339
        %v2356 = vmul.f32 %v2317, %v2338
        %v2357 = vmul.f32 %v2318, %v2339
        %v2358 = vmul.f32 %v2319, %v2338
        %v2359 = vmul.f32 %v2320, %v2339
        %v2360 = vmul.f32 %v2321, %v2338
        %v2361 = vmul.f32 %v2322, %v2339
        %v2362 = vmul.f32 %v2323, %v2338
        %v2363 = vmul.f32 %v2324, %v2339
        %v2364 = vmul.f32 %v2325, %v2338
        %v2365 = vmul.f32 %v2326, %v2339
        %v2366 = vmul.f32 %v2327, %v2338
        %v2367 = vmul.f32 %v2328, %v2339
        %v2368 = vmul.f32 %v2329, %v2338
        %v2369 = vmul.f32 %v2330, %v2339
        %v2370 = vmul.f32 %v2331, %v2338
        %v2371 = vmul.f32 %v2332, %v2339
        %v2372 = vadd.f32 %v2340, %v2341
        %v2373 = vrot.slane %v2372, 4
        %v2374 = vadd.f32 %v2372, %v2373
        %v2375 = vrot.slane %v2374, 2
        %v2376 = vadd.f32 %v2374, %v2375
        %v2377 = vrot.slane %v2376, 1
        %v2378 = vadd.f32 %v2376, %v2377
        %v2379 = vadd.f32 %v2342, %v2343
        %v2380 = vrot.slane %v2379, 4
        %v2381 = vadd.f32 %v2379, %v2380
        %v2382 = vrot.slane %v2381, 2
        %v2383 = vadd.f32 %v2381, %v2382
        %v2384 = vrot.slane %v2383, 1
        %v2385 = vadd.f32 %v2383, %v2384
        %v2386 = vadd.f32 %v2344, %v2345
        %v2387 = vrot.slane %v2386, 4
        %v2388 = vadd.f32 %v2386, %v2387
        %v2389 = vrot.slane %v2388, 2
        %v2390 = vadd.f32 %v2388, %v2389
        %v2391 = vrot.slane %v2390, 1
        %v2392 = vadd.f32 %v2390, %v2391
        %v2393 = vadd.f32 %v2346, %v2347
        %v2394 = vrot.slane %v2393, 4
        %v2395 = vadd.f32 %v2393, %v2394
        %v2396 = vrot.slane %v2395, 2
        %v2397 = vadd.f32 %v2395, %v2396
        %v2398 = vrot.slane %v2397, 1
        %v2399 = vadd.f32 %v2397, %v2398
        %v2400 = vadd.f32 %v2348, %v2349
        %v2401 = vrot.slane %v2400, 4
        %v2402 = vadd.f32 %v2400, %v2401
        %v2403 = vrot.slane %v2402, 2
        %v2404 = vadd.f32 %v2402, %v2403
        %v2405 = vrot.slane %v2404, 1
        %v2406 = vadd.f32 %v2404, %v2405
        %v2407 = vadd.f32 %v2350, %v2351
        %v2408 = vrot.slane %v2407, 4
        %v2409 = vadd.f32 %v2407, %v2408
        %v2410 = vrot.slane %v2409, 2
        %v2411 = vadd.f32 %v2409, %v2410
        %v2412 = vrot.slane %v2411, 1
        %v2413 = vadd.f32 %v2411, %v2412
        %v2414 = vadd.f32 %v2352, %v2353
        %v2415 = vrot.slane %v2414, 4
        %v2416 = vadd.f32 %v2414, %v2415
        %v2417 = vrot.slane %v2416, 2
        %v2418 = vadd.f32 %v2416, %v2417
        %v2419 = vrot.slane %v2418, 1
        %v2420 = vadd.f32 %v2418, %v2419
        %v2421 = vadd.f32 %v2354, %v2355
        %v2422 = vrot.slane %v2421, 4
        %v2423 = vadd.f32 %v2421, %v2422
        %v2424 = vrot.slane %v2423, 2
        %v2425 = vadd.f32 %v2423, %v2424
        %v2426 = vrot.slane %v2425, 1
        %v2427 = vadd.f32 %v2425, %v2426
        %v2428 = vadd.f32 %v2356, %v2357
        %v2429 = vrot.slane %v2428, 4
        %v2430 = vadd.f32 %v2428, %v2429
        %v2431 = vrot.slane %v2430, 2
        %v2432 = vadd.f32 %v2430, %v2431
        %v2433 = vrot.slane %v2432, 1
        %v2434 = vadd.f32 %v2432, %v2433
        %v2435 = vadd.f32 %v2358, %v2359
        %v2436 = vrot.slane %v2435, 4
        %v2437 = vadd.f32 %v2435, %v2436
        %v2438 = vrot.slane %v2437, 2
        %v2439 = vadd.f32 %v2437, %v2438
        %v2440 = vrot.slane %v2439, 1
        %v2441 = vadd.f32 %v2439, %v2440
        %v2442 = vadd.f32 %v2360, %v2361
        %v2443 = vrot.slane %v2442, 4
        %v2444 = vadd.f32 %v2442, %v2443
        %v2445 = vrot.slane %v2444, 2
        %v2446 = vadd.f32 %v2444, %v2445
        %v2447 = vrot.slane %v2446, 1
        %v2448 = vadd.f32 %v2446, %v2447
        %v2449 = vadd.f32 %v2362, %v2363
        %v2450 = vrot.slane %v2449, 4
        %v2451 = vadd.f32 %v2449, %v2450
        %v2452 = vrot.slane %v2451, 2
        %v2453 = vadd.f32 %v2451, %v2452
        %v2454 = vrot.slane %v2453, 1
        %v2455 = vadd.f32 %v2453, %v2454
        %v2456 = vadd.f32 %v2364, %v2365
        %v2457 = vrot.slane %v2456, 4
        %v2458 = vadd.f32 %v2456, %v2457
        %v2459 = vrot.slane %v2458, 2
        %v2460 = vadd.f32 %v2458, %v2459
        %v2461 = vrot.slane %v2460, 1
        %v2462 = vadd.f32 %v2460, %v2461
        %v2463 = vadd.f32 %v2366, %v2367
        %v2464 = vrot.slane %v2463, 4
        %v2465 = vadd.f32 %v2463, %v2464
        %v2466 = vrot.slane %v2465, 2
        %v2467 = vadd.f32 %v2465, %v2466
        %v2468 = vrot.slane %v2467, 1
        %v2469 = vadd.f32 %v2467, %v2468
        %v2470 = vadd.f32 %v2368, %v2369
        %v2471 = vrot.slane %v2470, 4
        %v2472 = vadd.f32 %v2470, %v2471
        %v2473 = vrot.slane %v2472, 2
        %v2474 = vadd.f32 %v2472, %v2473
        %v2475 = vrot.slane %v2474, 1
        %v2476 = vadd.f32 %v2474, %v2475
        %v2477 = vadd.f32 %v2370, %v2371
        %v2478 = vrot.slane %v2477, 4
        %v2479 = vadd.f32 %v2477, %v2478
        %v2480 = vrot.slane %v2479, 2
        %v2481 = vadd.f32 %v2479, %v2480
        %v2482 = vrot.slane %v2481, 1
        %v2483 = vadd.f32 %v2481, %v2482
        %v2484 = vpack.c.bf16 %v2378, %v2378
        %v2485 = vpack.c.bf16 %v2385, %v2385
        %v2486 = vpack.c.bf16 %v2392, %v2392
        %v2487 = vpack.c.bf16 %v2399, %v2399
        %v2488 = vpack.c.bf16 %v2406, %v2406
        %v2489 = vpack.c.bf16 %v2413, %v2413
        %v2490 = vpack.c.bf16 %v2420, %v2420
        %v2491 = vpack.c.bf16 %v2427, %v2427
        %v2492 = vpack.c.bf16 %v2434, %v2434
        %v2493 = vpack.c.bf16 %v2441, %v2441
        %v2494 = vpack.c.bf16 %v2448, %v2448
        %v2495 = vpack.c.bf16 %v2455, %v2455
        %v2496 = vpack.c.bf16 %v2462, %v2462
        %v2497 = vpack.c.bf16 %v2469, %v2469
        %v2498 = vpack.c.bf16 %v2476, %v2476
        %v2499 = vpack.c.bf16 %v2483, %v2483
        %v2500 = vld [vmem:[#allocation10] sm:$0xf]
        %v2501 = vld [vmem:[#allocation10 + $0x4] sm:$0xf]
        %v2502 = vld [vmem:[#allocation10 + $0x8] sm:$0xf]
        %v2503 = vld [vmem:[#allocation10 + $0xc] sm:$0xf]
        %v2504 = vld [vmem:[#allocation10 + $0x10] sm:$0xf]
        %v2505 = vld [vmem:[#allocation10 + $0x14] sm:$0xf]
        %v2506 = vld [vmem:[#allocation10 + $0x18] sm:$0xf]
        %v2507 = vld [vmem:[#allocation10 + $0x1c] sm:$0xf]
        %v2508 = vld [vmem:[#allocation10 + $0x20] sm:$0xf]
        %v2509 = vld [vmem:[#allocation10 + $0x24] sm:$0xf]
        %v2510 = vld [vmem:[#allocation10 + $0x28] sm:$0xf]
        %v2511 = vld [vmem:[#allocation10 + $0x2c] sm:$0xf]
        %v2512 = vld [vmem:[#allocation10 + $0x30] sm:$0xf]
        %v2513 = vld [vmem:[#allocation10 + $0x34] sm:$0xf]
        %v2514 = vld [vmem:[#allocation10 + $0x38] sm:$0xf]
        %v2515 = vld [vmem:[#allocation10 + $0x3c] sm:$0xf]
        %v2516 = vld [vmem:[%s5] sm:$0x1]
        %v2518 = vperm.slane %v2516, 0
        %v2536 = vunpack.c.l.b16 %v2484
        %v2537 = vunpack.c.l.b16 %v2485
        %v2538 = vunpack.c.l.b16 %v2486
        %v2539 = vunpack.c.l.b16 %v2487
        %v2540 = vunpack.c.l.b16 %v2488
        %v2541 = vunpack.c.l.b16 %v2489
        %v2542 = vunpack.c.l.b16 %v2490
        %v2543 = vunpack.c.l.b16 %v2491
        %v2544 = vunpack.c.l.b16 %v2492
        %v2545 = vunpack.c.l.b16 %v2493
        %v2546 = vunpack.c.l.b16 %v2494
        %v2547 = vunpack.c.l.b16 %v2495
        %v2548 = vunpack.c.l.b16 %v2496
        %v2549 = vunpack.c.l.b16 %v2497
        %v2550 = vunpack.c.l.b16 %v2498
        %v2551 = vunpack.c.l.b16 %v2499
        %vm2552 = vcmask 1041409
        %v2553 = vsel %vm2552, %v2537, %v2536
        %vm2554 = vcmask 1042434
        %v2555 = vsel %vm2554, %v2538, %v2553
        %vm2556 = vcmask 1043459
        %v2557 = vsel %vm2556, %v2539, %v2555
        %vm2558 = vcmask 1044484
        %v2559 = vsel %vm2558, %v2540, %v2557
        %vm2560 = vcmask 1045509
        %v2561 = vsel %vm2560, %v2541, %v2559
        %vm2562 = vcmask 1046534
        %v2563 = vsel %vm2562, %v2542, %v2561
        %vm2564 = vcmask 1047559
        %v2565 = vsel %vm2564, %v2543, %v2563
        %v2566 = vsel %vm2552, %v2545, %v2544
        %v2567 = vsel %vm2554, %v2546, %v2566
        %v2568 = vsel %vm2556, %v2547, %v2567
        %v2569 = vsel %vm2558, %v2548, %v2568
        %v2570 = vsel %vm2560, %v2549, %v2569
        %v2571 = vsel %vm2562, %v2550, %v2570
        %v2572 = vsel %vm2564, %v2551, %v2571
        %v2573 = vpack.c.b16 %v2572, %v2565
        %v2591 = vunpack.c.l.b16 %v2500
        %v2592 = vunpack.c.l.b16 %v2501
        %v2593 = vunpack.c.l.b16 %v2502
        %v2594 = vunpack.c.l.b16 %v2503
        %v2595 = vunpack.c.l.b16 %v2504
        %v2596 = vunpack.c.l.b16 %v2505
        %v2597 = vunpack.c.l.b16 %v2506
        %v2598 = vunpack.c.l.b16 %v2507
        %v2599 = vunpack.c.l.b16 %v2508
        %v2600 = vunpack.c.l.b16 %v2509
        %v2601 = vunpack.c.l.b16 %v2510
        %v2602 = vunpack.c.l.b16 %v2511
        %v2603 = vunpack.c.l.b16 %v2512
        %v2604 = vunpack.c.l.b16 %v2513
        %v2605 = vunpack.c.l.b16 %v2514
        %v2606 = vunpack.c.l.b16 %v2515
        %v2607 = vpack.c.b16 %v2592, %v2591
        %v2608 = vpack.c.b16 %v2594, %v2593
        %v2609 = vpack.c.b16 %v2596, %v2595
        %v2610 = vpack.c.b16 %v2598, %v2597
        %v2611 = vpack.c.b16 %v2600, %v2599
        %v2612 = vpack.c.b16 %v2602, %v2601
        %v2613 = vpack.c.b16 %v2604, %v2603
        %v2614 = vpack.c.b16 %v2606, %v2605
        %2623 = vmatpush.bf16.msra.mxu0 %v2614
        %2624 = vmatpush.bf16.msra.mxu0 %v2613
        %2625 = vmatpush.bf16.msra.mxu0 %v2612
        %2626 = vmatpush.bf16.msra.mxu0 %v2611
        %2627 = vmatpush.bf16.msra.mxu0 %v2610
        %2628 = vmatpush.bf16.msra.mxu0 %v2609
        %2629 = vmatpush.bf16.msra.mxu0 %v2608
        %2630 = vmatpush.bf16.msra.mxu0 %v2607
        %2631 = vmatmul.bf16.gmra.mxu0 %v2573
        %v2632 = vpop.f32.mrf.mxu0
        %v2633 = vadd.f32 %v2518, %v2632
        %v2634 = vpop.f32.mrf.mxu0
        %v2635 = vadd.f32 %v2518, %v2634
        %2636 = vdwg.mxu0
        %v2637 = vmax.f32 %v2633, 0.0
        %v2638 = vmax.f32 %v2635, 0.0
        %v2639 = vpack.c.bf16 %v2638, %v2637
        %s2640 = scalar_lea.vmem [#allocation10], 64
        %v2641 = vld [vmem:[%s2640] sm:$0xf]
        %v2642 = vld [vmem:[%s2640 + $0x4] sm:$0xf]
        %v2643 = vld [vmem:[%s2640 + $0x8] sm:$0xf]
        %v2644 = vld [vmem:[%s2640 + $0xc] sm:$0xf]
        %v2645 = vld [vmem:[%s2640 + $0x10] sm:$0xf]
        %v2646 = vld [vmem:[%s2640 + $0x14] sm:$0xf]
        %v2647 = vld [vmem:[%s2640 + $0x18] sm:$0xf]
        %v2648 = vld [vmem:[%s2640 + $0x1c] sm:$0xf]
        %v2649 = vld [vmem:[%s2640 + $0x20] sm:$0xf]
        %v2650 = vld [vmem:[%s2640 + $0x24] sm:$0xf]
        %v2651 = vld [vmem:[%s2640 + $0x28] sm:$0xf]
        %v2652 = vld [vmem:[%s2640 + $0x2c] sm:$0xf]
        %v2653 = vld [vmem:[%s2640 + $0x30] sm:$0xf]
        %v2654 = vld [vmem:[%s2640 + $0x34] sm:$0xf]
        %v2655 = vld [vmem:[%s2640 + $0x38] sm:$0xf]
        %v2656 = vld [vmem:[%s2640 + $0x3c] sm:$0xf]
        %s2657 = scalar_lea.vmem %s5, 1
        %v2658 = vld [vmem:[%s2657] sm:$0x1]
        %v2660 = vperm.slane %v2658, 0
        %v2678 = vunpack.c.l.b16 %v2641
        %v2679 = vunpack.c.l.b16 %v2642
        %v2680 = vunpack.c.l.b16 %v2643
        %v2681 = vunpack.c.l.b16 %v2644
        %v2682 = vunpack.c.l.b16 %v2645
        %v2683 = vunpack.c.l.b16 %v2646
        %v2684 = vunpack.c.l.b16 %v2647
        %v2685 = vunpack.c.l.b16 %v2648
        %v2686 = vunpack.c.l.b16 %v2649
        %v2687 = vunpack.c.l.b16 %v2650
        %v2688 = vunpack.c.l.b16 %v2651
        %v2689 = vunpack.c.l.b16 %v2652
        %v2690 = vunpack.c.l.b16 %v2653
        %v2691 = vunpack.c.l.b16 %v2654
        %v2692 = vunpack.c.l.b16 %v2655
        %v2693 = vunpack.c.l.b16 %v2656
        %v2694 = vpack.c.b16 %v2679, %v2678
        %v2695 = vpack.c.b16 %v2681, %v2680
        %v2696 = vpack.c.b16 %v2683, %v2682
        %v2697 = vpack.c.b16 %v2685, %v2684
        %v2698 = vpack.c.b16 %v2687, %v2686
        %v2699 = vpack.c.b16 %v2689, %v2688
        %v2700 = vpack.c.b16 %v2691, %v2690
        %v2701 = vpack.c.b16 %v2693, %v2692
        %2710 = vmatpush.bf16.msra.mxu0 %v2701
        %2711 = vmatpush.bf16.msra.mxu0 %v2700
        %2712 = vmatpush.bf16.msra.mxu0 %v2699
        %2713 = vmatpush.bf16.msra.mxu0 %v2698
        %2714 = vmatpush.bf16.msra.mxu0 %v2697
        %2715 = vmatpush.bf16.msra.mxu0 %v2696
        %2716 = vmatpush.bf16.msra.mxu0 %v2695
        %2717 = vmatpush.bf16.msra.mxu0 %v2694
        %2718 = vmatmul.bf16.gmra.mxu0 %v2639
        %v2719 = vpop.f32.mrf.mxu0
        %v2720 = vadd.f32 %v2660, %v2719
        %v2721 = vpop.f32.mrf.mxu0
        %v2722 = vadd.f32 %v2660, %v2721
        %2723 = vdwg.mxu0
        %2724 = vst [vmem:[%s362] sm:$0xff] %v2720
        %2725 = vst [vmem:[%s362 + $0x8] sm:$0xff] %v2722
        %s2726 = sand.u32 %s171, 1
        %s2727 = scalar_lea.sflag [#allocation4], %s2726
        %s2728 = sand.u32 %s171, 1
        %s2729 = smul.addr %s2728, 16
        %s2730 = scalar_lea.vmem [#allocation11], %s2729
        // Predicated region
        $region65: #{tpu_custom_call.1} parent=43 // pred_check
          %p2731 = pneg %p181
        $region66: #{tpu_custom_call.1} parent=43 // pred_check_branch
          %2733 = sbr.rel (%p2731) target = $region68
        $region67: #{tpu_custom_call.1} parent=43 // pred_region
          %2735 = vsyncadd %s2727, 0
          %s2736 = smul.addr %s27, 2
          %s2737 = smul.addr %s2736, 8
          %s2738 = scalar_lea.hbm %s6, %s2737
          %s2739 = sshll.u32 %s2730, 4
          %s2740 = int_to_ptr.vmem [resolvable:$true] %s2739
          %s2741 = sshll.u32 %s2738, 4
          %s2742 = int_to_ptr.hbm [resolvable:$true] %s2741
          %2747 = dma.vmem_to_hbm [thread:$0]  %s2740, 256, %s2742, %s2727, 128, 128, 8
        $region68: #{tpu_custom_call.1} parent=43 // pred_fallthru
          _
      $region44: #{tpu_custom_call.1} parent=5 // pred_fallthru
        _
      %p2748 = scmp.le.s32.totalorder 2, %s22
      // Predicated region
      $region69: #{tpu_custom_call.1} parent=5 // pred_check
        %p2749 = pneg %p2748
      $region70: #{tpu_custom_call.1} parent=5 // pred_check_branch
        %2751 = sbr.rel (%p2749) target = $region72
      $region71: #{tpu_custom_call.1} parent=5 // pred_region
        %s2752 = ssub.s32 %s22, 2
        // Predicated region
        $region73: #{tpu_custom_call.1} parent=71 // pred_check
          %p2753 = pneg %p187
        $region74: #{tpu_custom_call.1} parent=71 // pred_check_branch
          %2755 = sbr.rel (%p2753) target = $region76
        $region75: #{tpu_custom_call.1} parent=71 // pred_region
          %s2756 = sand.u32 %s172, 1
          %s2757 = scalar_lea.sflag [#allocation4], %s2756
          %s2758 = sand.u32 %s172, 1
          %s2759 = smul.addr %s2758, 16
          %s2760 = scalar_lea.vmem [#allocation11], %s2759
          %2762 = dma.done %s2757, 256
        $region76: #{tpu_custom_call.1} parent=71 // pred_fallthru
          _
      $region72: #{tpu_custom_call.1} parent=5 // pred_fallthru
        _
    $region6: #{tpu_custom_call.1} parent=1 // loop_footer
      %s26 = sadd.s32 1, %s22
    $region7: #{tpu_custom_call.1} parent=1 // loop_footer_branch
      %21 = sbr.rel target = $region3
    $region8: #{tpu_custom_call.1} parent=1 // loop_exit
      _
    %2763 = vsyncpa [#allocation3], 1
    %s2764 = scalar_lea.sflag [#allocation3], 1
    %2765 = vsyncpa %s2764, 1
    %2766 = vsyncpa [#allocation6], 1
    %s2767 = scalar_lea.sflag [#allocation6], 1
    %2768 = vsyncpa %s2767, 1
    %2769 = vsyncpa [#allocation9], 1
    %2770 = vsyncpa [#allocation4], 1
    %s2771 = scalar_lea.sflag [#allocation4], 1
    %2772 = vsyncpa %s2771, 1

</llo_original>
